<compile_context>
chip_gen: v7x
topology: tpu7x:2x2x1
jax: 0.10.0
libtpu: 0.0.40
codegen_flags: <defaults>
</compile_context>

<pallas_src>
import jax
import jax.numpy as jnp
from jax.experimental import pallas as pl
from jax.experimental.pallas import tpu as pltpu


def _round_up(x, m):
    return (x + m - 1) // m * m


def _num_tensorcores():
    """2 on v7x (megacore sharding target), else 1."""
    try:
        kind = jax.devices()[0].device_kind.lower()
        if "v7" in kind or "7x" in kind:
            return 2
    except Exception:
        pass
    return 1


def vae_kernel(xe_ref,                   # merged [x | eps] activations (TN, D+d)
               w_e1, w_e2, w_he,         # encoder trunk + fused encoder heads
               w_d1, w_d2, w_hd,         # decoder trunk + fused (and zero-padded) decoder heads
               b_ref,                    # packed, 128-lane-aligned biases (1, 6*128)
               out_ref):                 # lane-dense output slab (TN, out_w)
    f32 = jnp.float32
    D, H = w_e1.shape
    d = w_d1.shape[0]
    hd_w = w_hd.shape[1]                 # 2*D + zero-pad columns (folded output padding)

    # ---- unpack the packed bias buffer: each segment sits in its own 128-lane slot ----
    widths = (H, H, d + 1, H, H, hd_w)
    offs = []
    o = 0
    for w in widths:
        offs.append(o)
        o += _round_up(w, 128)
    b_e1 = b_ref[:, offs[0]:offs[0] + H]
    b_e2 = b_ref[:, offs[1]:offs[1] + H]
    b_he = b_ref[:, offs[2]:offs[2] + d + 1]
    b_d1 = b_ref[:, offs[3]:offs[3] + H]
    b_d2 = b_ref[:, offs[4]:offs[4] + H]
    b_hd = b_ref[:, offs[5]:offs[5] + hd_w]

    # ---- split the merged activation operand (static lane slices) ----
    xe = xe_ref[...]
    x = xe[:, :D]
    eps = xe[:, D:D + d]

    # ---- encoder trunk: Linear(D,H) -> tanh -> Linear(H,H) -> tanh ----
    h = jnp.tanh(jnp.dot(x, w_e1[...], preferred_element_type=f32) + b_e1)
    h = jnp.tanh(jnp.dot(h, w_e2[...], preferred_element_type=f32) + b_e2)

    # ---- fused encoder heads: one dot -> [mu_z | log_var_z] ----
    y_he = jnp.dot(h, w_he[...], preferred_element_type=f32) + b_he    # (TN, d+1)
    mu_z = y_he[:, :d]
    log_var_z = y_he[:, d:d + 1]

    # ---- reparametrization trick: z = mu + exp(0.5 * log_var) * eps ----
    z = mu_z + jnp.exp(0.5 * log_var_z) * eps                          # (TN, d)

    # ---- decoder trunk: Linear(d,H) -> tanh -> Linear(H,H) -> tanh ----
    g = jnp.tanh(jnp.dot(z, w_d1[...], preferred_element_type=f32) + b_d1)
    g = jnp.tanh(jnp.dot(g, w_d2[...], preferred_element_type=f32) + b_d2)

    # ---- fused decoder heads (zero columns folded into the weight) ----
    y_hd = jnp.dot(g, w_hd[...], preferred_element_type=f32) + b_hd    # (TN, 2D+pad)

    # ---- single lane-dense output slab: [mu_x | log_var_x | 0-pad | z | mu_z | log_var_z] ----
    out_ref[...] = jnp.concatenate([y_hd, z, y_he], axis=-1)


def vae_forward(x, eps, params, *, tile_cap=2048):
    """params: PyTorch-style dict of (in,out) weights and (1,out) biases."""
    N, D = x.shape
    H = params["w_e1"].shape[1]
    d = params["w_mu_e"].shape[1]

    # ---- one-time host-side fusion: head weights, folded output zero-pad, packed biases ----
    out_w = max(128, _round_up(2 * D + 2 * d + 1, 128))
    pad_cols = out_w - (2 * D + 2 * d + 1)
    hd_w = 2 * D + pad_cols

    w_he = jnp.concatenate([params["w_mu_e"], params["w_lv_e"]], axis=1)      # (H, d+1)
    b_he = jnp.concatenate([params["b_mu_e"], params["b_lv_e"]], axis=1)

    w_hd = jnp.concatenate([params["w_mu_d"], params["w_lv_d"]], axis=1)      # (H, 2D)
    b_hd = jnp.concatenate([params["b_mu_d"], params["b_lv_d"]], axis=1)
    w_hd = jnp.pad(w_hd, ((0, 0), (0, pad_cols)))                             # (H, hd_w)
    b_hd = jnp.pad(b_hd, ((0, 0), (0, pad_cols)))                             # (1, hd_w)

    def pack_biases(segs):
        padded = [jnp.pad(s, ((0, 0), (0, _round_up(s.shape[1], 128) - s.shape[1])))
                  for s in segs]
        return jnp.concatenate(padded, axis=1)

    b_pack = pack_biases([params["b_e1"], params["b_e2"], b_he,
                          params["b_d1"], params["b_d2"], b_hd])
    bw = b_pack.shape[1]                                                      # 6 * 128

    # ---- merge x / eps into a single activation operand ----
    xe = jnp.concatenate([x, eps], axis=1)                                    # (N, D+d)

    # ---- batch tiling: one tile per TensorCore, capped at tile_cap rows ----
    num_tc = _num_tensorcores()
    per_core = _round_up(-(-N // num_tc), 8)           # ceil(N / num_tc), multiple of 8
    tn = min(tile_cap, per_core, _round_up(N, 8))
    n_pad = _round_up(N, tn)
    if n_pad != N:
        xe = jnp.pad(xe, ((0, n_pad - N), (0, 0)))

    row = lambda i: (i, 0)     # batch-tiled activations / output
    const = lambda i: (0, 0)   # weights / biases stay VMEM-resident across steps

    slab = pl.pallas_call(
        vae_kernel,
        out_shape=jax.ShapeDtypeStruct((n_pad, out_w), jnp.float32),
        grid=(n_pad // tn,),
        in_specs=[
            pl.BlockSpec((tn, D + d), row),      # merged [x | eps]
            pl.BlockSpec((D, H), const),         # w_e1
            pl.BlockSpec((H, H), const),         # w_e2
            pl.BlockSpec((H, d + 1), const),     # w_he (fused mu_enc | log_var_enc)
            pl.BlockSpec((d, H), const),         # w_d1
            pl.BlockSpec((H, H), const),         # w_d2
            pl.BlockSpec((H, hd_w), const),      # w_hd (fused mu_dec | log_var_dec | 0-pad)
            pl.BlockSpec((1, bw), const),        # packed, lane-aligned biases
        ],
        out_specs=pl.BlockSpec((tn, out_w), row),
        compiler_params=pltpu.CompilerParams(
            dimension_semantics=("parallel",)),
    )(xe,
      params["w_e1"], params["w_e2"], w_he,
      params["w_d1"], params["w_d2"], w_hd,
      b_pack)

    mu_x = slab[:N, 0:D]
    log_var_x = slab[:N, D:2 * D]
    z = slab[:N, hd_w:hd_w + d]
    mu_z = slab[:N, hd_w + d:hd_w + 2 * d]
    log_var_z = slab[:N, hd_w + 2 * d:hd_w + 2 * d + 1]
    return mu_x, log_var_x, z, mu_z, log_var_z


def make_params(key, d, D, H):
    """Deterministic synthetic parameters. Weights stored as (in, out)."""
    keys = jax.random.split(key, 8)

    def lin(k, n_in, n_out):
        w = 0.1 * jax.random.normal(k, (n_in, n_out), jnp.float32)
        b = 0.01 * jnp.arange(n_out, dtype=jnp.float32).reshape(1, n_out)
        return w, b

    p = {}
    p["w_e1"], p["b_e1"] = lin(keys[0], D, H)
    p["w_e2"], p["b_e2"] = lin(keys[1], H, H)
    p["w_mu_e"], p["b_mu_e"] = lin(keys[2], H, d)
    p["w_lv_e"], p["b_lv_e"] = lin(keys[3], H, 1)   # log_var_enc: out_features=1 per the module
    p["w_d1"], p["b_d1"] = lin(keys[4], d, H)
    p["w_d2"], p["b_d2"] = lin(keys[5], H, H)
    p["w_mu_d"], p["b_mu_d"] = lin(keys[6], H, D)
    p["w_lv_d"], p["b_lv_d"] = lin(keys[7], H, D)
    return p


def vae_reference(x, eps, p):
    """Pure-JAX reference mirroring the PyTorch forward (unfused)."""
    h = jnp.tanh(x @ p["w_e1"] + p["b_e1"])
    h = jnp.tanh(h @ p["w_e2"] + p["b_e2"])
    mu_z = h @ p["w_mu_e"] + p["b_mu_e"]
    log_var_z = h @ p["w_lv_e"] + p["b_lv_e"]
    z = mu_z + jnp.exp(0.5 * log_var_z) * eps
    g = jnp.tanh(z @ p["w_d1"] + p["b_d1"])
    g = jnp.tanh(g @ p["w_d2"] + p["b_d2"])
    mu_x = g @ p["w_mu_d"] + p["b_mu_d"]
    log_var_x = g @ p["w_lv_d"] + p["b_lv_d"]
    return mu_x, log_var_x, z, mu_z, log_var_z


if __name__ == "__main__":
    # Data dim D=32, hidden H=32, latent d=8; batch N=256.
    N, D, H, d = 256, 32, 32, 8

    root = jax.random.PRNGKey(0)
    k_params, k_x, k_eps = jax.random.split(root, 3)

    params = make_params(k_params, d, D, H)
    x = jax.random.normal(k_x, (N, D), jnp.float32)
    # epsilon = torch.randn_like(mu_z): drawn outside the kernel (deterministic input).
    eps = jax.random.normal(k_eps, (N, d), jnp.float32)

    outs = jax.block_until_ready(vae_forward(x, eps, params))
    refs = vae_reference(x, eps, params)

    names = ("mu_x", "log_var_x", "z_rep", "mu_z", "log_var_z")
    for name, o, r in zip(names, outs, refs):
        assert o.shape == r.shape and o.dtype == r.dtype, name
        assert jnp.allclose(o, r, atol=3e-5, rtol=3e-5), f"mismatch vs reference: {name}"

    print("KERNEL_OK")
</pallas_src>

<mosaic_0001>
module attributes {stable_mosaic.version = 11 : i64} {
  func.func @vae_kernel(%arg0: i32, %arg1: memref<256x40xf32, #tpu.memory_space<vmem>>, %arg2: memref<32x32xf32, #tpu.memory_space<vmem>>, %arg3: memref<32x32xf32, #tpu.memory_space<vmem>>, %arg4: memref<32x9xf32, #tpu.memory_space<vmem>>, %arg5: memref<8x32xf32, #tpu.memory_space<vmem>>, %arg6: memref<32x32xf32, #tpu.memory_space<vmem>>, %arg7: memref<32x111xf32, #tpu.memory_space<vmem>>, %arg8: memref<1x768xf32, #tpu.memory_space<vmem>>, %arg9: memref<256x128xf32, #tpu.memory_space<vmem>>) attributes {dimension_semantics = [#tpu.dimension_semantics<parallel>], iteration_bounds = array<i64: 1>, scalar_prefetch = 0 : i64, scratch_operands = 0 : i64, tpu.core_type = #tpu.core_type<tc>, window_params = [{transform_indices = @transform_0, window_bounds = array<i64: 256, 40>}, {pipeline_mode = #tpu.pipeline_mode<synchronous>, transform_indices = @transform_1, window_bounds = array<i64: 32, 32>}, {pipeline_mode = #tpu.pipeline_mode<synchronous>, transform_indices = @transform_2, window_bounds = array<i64: 32, 32>}, {pipeline_mode = #tpu.pipeline_mode<synchronous>, transform_indices = @transform_3, window_bounds = array<i64: 32, 9>}, {pipeline_mode = #tpu.pipeline_mode<synchronous>, transform_indices = @transform_4, window_bounds = array<i64: 8, 32>}, {pipeline_mode = #tpu.pipeline_mode<synchronous>, transform_indices = @transform_5, window_bounds = array<i64: 32, 32>}, {pipeline_mode = #tpu.pipeline_mode<synchronous>, transform_indices = @transform_6, window_bounds = array<i64: 32, 111>}, {pipeline_mode = #tpu.pipeline_mode<synchronous>, transform_indices = @transform_7, window_bounds = array<i64: 1, 768>}, {transform_indices = @transform_8, window_bounds = array<i64: 256, 128>}]} {
    %c0 = arith.constant 0 : index
    %c0_0 = arith.constant 0 : index
    %0 = vector.load %arg8[%c0, %c0_0] : memref<1x768xf32, #tpu.memory_space<vmem>>, vector<1x32xf32>
    %c0_1 = arith.constant 0 : index
    %c128 = arith.constant 128 : index
    %1 = vector.load %arg8[%c0_1, %c128] : memref<1x768xf32, #tpu.memory_space<vmem>>, vector<1x32xf32>
    %c0_2 = arith.constant 0 : index
    %c256 = arith.constant 256 : index
    %2 = vector.load %arg8[%c0_2, %c256] : memref<1x768xf32, #tpu.memory_space<vmem>>, vector<1x9xf32>
    %c0_3 = arith.constant 0 : index
    %c384 = arith.constant 384 : index
    %3 = vector.load %arg8[%c0_3, %c384] : memref<1x768xf32, #tpu.memory_space<vmem>>, vector<1x32xf32>
    %c0_4 = arith.constant 0 : index
    %c512 = arith.constant 512 : index
    %4 = vector.load %arg8[%c0_4, %c512] : memref<1x768xf32, #tpu.memory_space<vmem>>, vector<1x32xf32>
    %c0_5 = arith.constant 0 : index
    %c640 = arith.constant 640 : index
    %5 = vector.load %arg8[%c0_5, %c640] : memref<1x768xf32, #tpu.memory_space<vmem>>, vector<1x111xf32>
    %c0_6 = arith.constant 0 : index
    %c0_7 = arith.constant 0 : index
    %6 = vector.load %arg1[%c0_6, %c0_7] : memref<256x40xf32, #tpu.memory_space<vmem>>, vector<256x40xf32>
    %7 = vector.extract_strided_slice %6 {offsets = [0, 0], sizes = [256, 32], strides = [1, 1]} : vector<256x40xf32> to vector<256x32xf32>
    %8 = vector.extract_strided_slice %6 {offsets = [0, 32], sizes = [256, 8], strides = [1, 1]} : vector<256x40xf32> to vector<256x8xf32>
    %c0_8 = arith.constant 0 : index
    %c0_9 = arith.constant 0 : index
    %9 = vector.load %arg2[%c0_8, %c0_9] : memref<32x32xf32, #tpu.memory_space<vmem>>, vector<32x32xf32>
    %cst = arith.constant dense<0.000000e+00> : vector<256x32xf32>
    %10 = tpu.matmul %7, %9, %cst {dimension_numbers = #tpu.dot_dimension_numbers<[1], [0], [0], [1], [0, 0, 1, 1], [], []>} : vector<256x32xf32>, vector<32x32xf32>, vector<256x32xf32> -> vector<256x32xf32>
    %11 = vector.broadcast %0 : vector<1x32xf32> to vector<256x32xf32>
    %12 = arith.addf %10, %11 : vector<256x32xf32>
    %13 = math.tanh %12 : vector<256x32xf32>
    %c0_10 = arith.constant 0 : index
    %c0_11 = arith.constant 0 : index
    %14 = vector.load %arg3[%c0_10, %c0_11] : memref<32x32xf32, #tpu.memory_space<vmem>>, vector<32x32xf32>
    %cst_12 = arith.constant dense<0.000000e+00> : vector<256x32xf32>
    %15 = tpu.matmul %13, %14, %cst_12 {dimension_numbers = #tpu.dot_dimension_numbers<[1], [0], [0], [1], [0, 0, 1, 1], [], []>} : vector<256x32xf32>, vector<32x32xf32>, vector<256x32xf32> -> vector<256x32xf32>
    %16 = vector.broadcast %1 : vector<1x32xf32> to vector<256x32xf32>
    %17 = arith.addf %15, %16 : vector<256x32xf32>
    %18 = math.tanh %17 : vector<256x32xf32>
    %c0_13 = arith.constant 0 : index
    %c0_14 = arith.constant 0 : index
    %19 = vector.load %arg4[%c0_13, %c0_14] : memref<32x9xf32, #tpu.memory_space<vmem>>, vector<32x9xf32>
    %cst_15 = arith.constant dense<0.000000e+00> : vector<256x9xf32>
    %20 = tpu.matmul %18, %19, %cst_15 {dimension_numbers = #tpu.dot_dimension_numbers<[1], [0], [0], [1], [0, 0, 1, 1], [], []>} : vector<256x32xf32>, vector<32x9xf32>, vector<256x9xf32> -> vector<256x9xf32>
    %21 = vector.broadcast %2 : vector<1x9xf32> to vector<256x9xf32>
    %22 = arith.addf %20, %21 : vector<256x9xf32>
    %23 = vector.extract_strided_slice %22 {offsets = [0, 0], sizes = [256, 8], strides = [1, 1]} : vector<256x9xf32> to vector<256x8xf32>
    %24 = vector.extract_strided_slice %22 {offsets = [0, 8], sizes = [256, 1], strides = [1, 1]} : vector<256x9xf32> to vector<256x1xf32>
    %cst_16 = arith.constant 5.000000e-01 : f32
    %25 = vector.broadcast %cst_16 : f32 to vector<256x1xf32>
    %26 = arith.mulf %25, %24 : vector<256x1xf32>
    %27 = math.exp %26 : vector<256x1xf32>
    %28 = vector.broadcast %27 : vector<256x1xf32> to vector<256x8xf32>
    %29 = arith.mulf %28, %8 : vector<256x8xf32>
    %30 = arith.addf %23, %29 : vector<256x8xf32>
    %c0_17 = arith.constant 0 : index
    %c0_18 = arith.constant 0 : index
    %31 = vector.load %arg5[%c0_17, %c0_18] : memref<8x32xf32, #tpu.memory_space<vmem>>, vector<8x32xf32>
    %cst_19 = arith.constant dense<0.000000e+00> : vector<256x32xf32>
    %32 = tpu.matmul %30, %31, %cst_19 {dimension_numbers = #tpu.dot_dimension_numbers<[1], [0], [0], [1], [0, 0, 1, 1], [], []>} : vector<256x8xf32>, vector<8x32xf32>, vector<256x32xf32> -> vector<256x32xf32>
    %33 = vector.broadcast %3 : vector<1x32xf32> to vector<256x32xf32>
    %34 = arith.addf %32, %33 : vector<256x32xf32>
    %35 = math.tanh %34 : vector<256x32xf32>
    %c0_20 = arith.constant 0 : index
    %c0_21 = arith.constant 0 : index
    %36 = vector.load %arg6[%c0_20, %c0_21] : memref<32x32xf32, #tpu.memory_space<vmem>>, vector<32x32xf32>
    %cst_22 = arith.constant dense<0.000000e+00> : vector<256x32xf32>
    %37 = tpu.matmul %35, %36, %cst_22 {dimension_numbers = #tpu.dot_dimension_numbers<[1], [0], [0], [1], [0, 0, 1, 1], [], []>} : vector<256x32xf32>, vector<32x32xf32>, vector<256x32xf32> -> vector<256x32xf32>
    %38 = vector.broadcast %4 : vector<1x32xf32> to vector<256x32xf32>
    %39 = arith.addf %37, %38 : vector<256x32xf32>
    %40 = math.tanh %39 : vector<256x32xf32>
    %c0_23 = arith.constant 0 : index
    %c0_24 = arith.constant 0 : index
    %41 = vector.load %arg7[%c0_23, %c0_24] : memref<32x111xf32, #tpu.memory_space<vmem>>, vector<32x111xf32>
    %cst_25 = arith.constant dense<0.000000e+00> : vector<256x111xf32>
    %42 = tpu.matmul %40, %41, %cst_25 {dimension_numbers = #tpu.dot_dimension_numbers<[1], [0], [0], [1], [0, 0, 1, 1], [], []>} : vector<256x32xf32>, vector<32x111xf32>, vector<256x111xf32> -> vector<256x111xf32>
    %43 = vector.broadcast %5 : vector<1x111xf32> to vector<256x111xf32>
    %44 = arith.addf %42, %43 : vector<256x111xf32>
    %45 = tpu.concatenate %44, %30, %22 in 1 : vector<256x111xf32>, vector<256x8xf32>, vector<256x9xf32> -> vector<256x128xf32>
    %c0_26 = arith.constant 0 : index
    %c0_27 = arith.constant 0 : index
    %46 = vector.load %arg9[%c0_26, %c0_27] : memref<256x128xf32, #tpu.memory_space<vmem>>, vector<256x128xf32>
    tpu.vector_store %arg9[%c0_26, %c0_27], %45 {strides = array<i32>} : memref<256x128xf32, #tpu.memory_space<vmem>>, vector<256x128xf32>,
    return
  }
  func.func @transform_0(%arg0: i32) -> (i32, i32) {
    %c0_i32 = arith.constant 0 : i32
    %c0_i32_0 = arith.constant 0 : i32
    return %arg0, %c0_i32 : i32, i32
  }
  func.func @transform_1(%arg0: i32) -> (i32, i32) {
    %c0_i32 = arith.constant 0 : i32
    %c0_i32_0 = arith.constant 0 : i32
    %c0_i32_1 = arith.constant 0 : i32
    return %c0_i32, %c0_i32_0 : i32, i32
  }
  func.func @transform_2(%arg0: i32) -> (i32, i32) {
    %c0_i32 = arith.constant 0 : i32
    %c0_i32_0 = arith.constant 0 : i32
    %c0_i32_1 = arith.constant 0 : i32
    return %c0_i32, %c0_i32_0 : i32, i32
  }
  func.func @transform_3(%arg0: i32) -> (i32, i32) {
    %c0_i32 = arith.constant 0 : i32
    %c0_i32_0 = arith.constant 0 : i32
    %c0_i32_1 = arith.constant 0 : i32
    return %c0_i32, %c0_i32_0 : i32, i32
  }
  func.func @transform_4(%arg0: i32) -> (i32, i32) {
    %c0_i32 = arith.constant 0 : i32
    %c0_i32_0 = arith.constant 0 : i32
    %c0_i32_1 = arith.constant 0 : i32
    return %c0_i32, %c0_i32_0 : i32, i32
  }
  func.func @transform_5(%arg0: i32) -> (i32, i32) {
    %c0_i32 = arith.constant 0 : i32
    %c0_i32_0 = arith.constant 0 : i32
    %c0_i32_1 = arith.constant 0 : i32
    return %c0_i32, %c0_i32_0 : i32, i32
  }
  func.func @transform_6(%arg0: i32) -> (i32, i32) {
    %c0_i32 = arith.constant 0 : i32
    %c0_i32_0 = arith.constant 0 : i32
    %c0_i32_1 = arith.constant 0 : i32
    return %c0_i32, %c0_i32_0 : i32, i32
  }
  func.func @transform_7(%arg0: i32) -> (i32, i32) {
    %c0_i32 = arith.constant 0 : i32
    %c0_i32_0 = arith.constant 0 : i32
    %c0_i32_1 = arith.constant 0 : i32
    return %c0_i32, %c0_i32_0 : i32, i32
  }
  func.func @transform_8(%arg0: i32) -> (i32, i32) {
    %c0_i32 = arith.constant 0 : i32
    %c0_i32_0 = arith.constant 0 : i32
    return %arg0, %c0_i32 : i32, i32
  }
}

</mosaic_0001>

<llo_original>
// kernel: tpu_custom_call.1
$region0: #{tpu_custom_call.1}
  #allocation0 [shape = 'u32[]', space=smem, size = 0x4, offset = 0x4, fixed_abs, tag = 'smem constant byte address 0x4 - core index']
  #allocation1 [shape = 'u32[144,128]{1,0:T(1,128)}', space=vmem, size = 0x12000, scoped, tag = 'internal scratch']
  %s0 = inlined_call_operand.vmem [shape: f32[256,40], index: 0, kind: input, shape index: {}]
  %s1 = inlined_call_operand.vmem [shape: f32[32,32], index: 1, kind: input, shape index: {}]
  %s2 = inlined_call_operand.vmem [shape: f32[32,32], index: 2, kind: input, shape index: {}]
  %s3 = inlined_call_operand.vmem [shape: f32[32,9], index: 3, kind: input, shape index: {}]
  %s4 = inlined_call_operand.vmem [shape: f32[8,32], index: 4, kind: input, shape index: {}]
  %s5 = inlined_call_operand.vmem [shape: f32[32,32], index: 5, kind: input, shape index: {}]
  %s6 = inlined_call_operand.vmem [shape: f32[32,111], index: 6, kind: input, shape index: {}]
  %s7 = inlined_call_operand.vmem [shape: f32[1,768], index: 7, kind: input, shape index: {}]
  %s8 = inlined_call_operand.hbm [shape: f32[256,128], index: 8, kind: output, shape index: {}]
  %s9 = sld [smem:[#allocation0]]
  $region42: #{tpu_custom_call.1} parent=0
    _
  %s11 = ssub.s32 1, %s9
  %s12 = scalar_select 0, %s11, %s9
  $region1: #{tpu_custom_call.1} parent=0
    #allocation2 [shape = 'u8[131072]{0}', space=vmem, size = 0x20000, scoped, tag = 'output window, operand 0, single buffered']
    #allocation3 [shape = 's32[1]{0}', space=sflag, size = 0x4, scoped, tag = 'scoped memory for tpu_custom_call.1']
    %13 = vsyncpa [#allocation3], 0
    // Predicated region
    $region2: #{tpu_custom_call.1} parent=1 // pred_check
      _
    $region3: #{tpu_custom_call.1} parent=1 // pred_check_branch
      %15 = sbr.rel (0) target = $region5
    $region4: #{tpu_custom_call.1} parent=1 // pred_region
      _
    $region5: #{tpu_custom_call.1} parent=1 // pred_fallthru
      _
    // Predicated region
    $region6: #{tpu_custom_call.1} parent=1 // pred_check
      _
    $region7: #{tpu_custom_call.1} parent=1 // pred_check_branch
      %17 = sbr.rel (0) target = $region9
    $region8: #{tpu_custom_call.1} parent=1 // pred_region
      _
    $region9: #{tpu_custom_call.1} parent=1 // pred_fallthru
      _
    // Predicated region
    $region10: #{tpu_custom_call.1} parent=1 // pred_check
      _
    $region11: #{tpu_custom_call.1} parent=1 // pred_check_branch
      %19 = sbr.rel (0) target = $region13
    $region12: #{tpu_custom_call.1} parent=1 // pred_region
      _
    $region13: #{tpu_custom_call.1} parent=1 // pred_fallthru
      _
    // Predicated region
    $region14: #{tpu_custom_call.1} parent=1 // pred_check
      _
    $region15: #{tpu_custom_call.1} parent=1 // pred_check_branch
      %21 = sbr.rel (0) target = $region17
    $region16: #{tpu_custom_call.1} parent=1 // pred_region
      _
    $region17: #{tpu_custom_call.1} parent=1 // pred_fallthru
      _
    // Predicated region
    $region18: #{tpu_custom_call.1} parent=1 // pred_check
      _
    $region19: #{tpu_custom_call.1} parent=1 // pred_check_branch
      %23 = sbr.rel (0) target = $region21
    $region20: #{tpu_custom_call.1} parent=1 // pred_region
      _
    $region21: #{tpu_custom_call.1} parent=1 // pred_fallthru
      _
    // Predicated region
    $region22: #{tpu_custom_call.1} parent=1 // pred_check
      _
    $region23: #{tpu_custom_call.1} parent=1 // pred_check_branch
      %25 = sbr.rel (0) target = $region25
    $region24: #{tpu_custom_call.1} parent=1 // pred_region
      _
    $region25: #{tpu_custom_call.1} parent=1 // pred_fallthru
      _
    // Predicated region
    $region26: #{tpu_custom_call.1} parent=1 // pred_check
      _
    $region27: #{tpu_custom_call.1} parent=1 // pred_check_branch
      %27 = sbr.rel (0) target = $region29
    $region28: #{tpu_custom_call.1} parent=1 // pred_region
      _
    $region29: #{tpu_custom_call.1} parent=1 // pred_fallthru
      _
    // Predicated region
    $region30: #{tpu_custom_call.1} parent=1 // pred_check
      _
    $region31: #{tpu_custom_call.1} parent=1 // pred_check_branch
      %29 = sbr.rel (0) target = $region33
    $region32: #{tpu_custom_call.1} parent=1 // pred_region
      _
    $region33: #{tpu_custom_call.1} parent=1 // pred_fallthru
      _
    %v30 = vld [vmem:[%s7] sm:$0x1]
    %v31 = vld [vmem:[%s7 + $0x1] sm:$0x1]
    %v32 = vld [vmem:[%s7 + $0x2] sm:$0x1]
    %v33 = vld [vmem:[%s7 + $0x3] sm:$0x1]
    %v34 = vld [vmem:[%s7 + $0x4] sm:$0x1]
    %v35 = vld [vmem:[%s7 + $0x5] sm:$0x1]
    %v36 = vld [vmem:[%s0] sm:$0xff]
    %v37 = vld [vmem:[%s0 + $0x8] sm:$0xff]
    %v38 = vld [vmem:[%s0 + $0x10] sm:$0xff]
    %v39 = vld [vmem:[%s0 + $0x18] sm:$0xff]
    %v40 = vld [vmem:[%s0 + $0x20] sm:$0xff]
    %v41 = vld [vmem:[%s0 + $0x28] sm:$0xff]
    %v42 = vld [vmem:[%s0 + $0x30] sm:$0xff]
    %v43 = vld [vmem:[%s0 + $0x38] sm:$0xff]
    %v44 = vld [vmem:[%s0 + $0x40] sm:$0xff]
    %v45 = vld [vmem:[%s0 + $0x48] sm:$0xff]
    %v46 = vld [vmem:[%s0 + $0x50] sm:$0xff]
    %v47 = vld [vmem:[%s0 + $0x58] sm:$0xff]
    %v48 = vld [vmem:[%s0 + $0x60] sm:$0xff]
    %v49 = vld [vmem:[%s0 + $0x68] sm:$0xff]
    %v50 = vld [vmem:[%s0 + $0x70] sm:$0xff]
    %v51 = vld [vmem:[%s0 + $0x78] sm:$0xff]
    %v52 = vld [vmem:[%s0 + $0x80] sm:$0xff]
    %v53 = vld [vmem:[%s0 + $0x88] sm:$0xff]
    %v54 = vld [vmem:[%s0 + $0x90] sm:$0xff]
    %v55 = vld [vmem:[%s0 + $0x98] sm:$0xff]
    %v56 = vld [vmem:[%s0 + $0xa0] sm:$0xff]
    %v57 = vld [vmem:[%s0 + $0xa8] sm:$0xff]
    %v58 = vld [vmem:[%s0 + $0xb0] sm:$0xff]
    %v59 = vld [vmem:[%s0 + $0xb8] sm:$0xff]
    %v60 = vld [vmem:[%s0 + $0xc0] sm:$0xff]
    %v61 = vld [vmem:[%s0 + $0xc8] sm:$0xff]
    %v62 = vld [vmem:[%s0 + $0xd0] sm:$0xff]
    %v63 = vld [vmem:[%s0 + $0xd8] sm:$0xff]
    %v64 = vld [vmem:[%s0 + $0xe0] sm:$0xff]
    %v65 = vld [vmem:[%s0 + $0xe8] sm:$0xff]
    %v66 = vld [vmem:[%s0 + $0xf0] sm:$0xff]
    %v67 = vld [vmem:[%s0 + $0xf8] sm:$0xff]
    %v68 = vld [vmem:[%s1] sm:$0xff]
    %v69 = vld [vmem:[%s1 + $0x8] sm:$0xff]
    %v70 = vld [vmem:[%s1 + $0x10] sm:$0xff]
    %v71 = vld [vmem:[%s1 + $0x18] sm:$0xff]
    %v73 = vlaneseq
    %v74 = vshrl.u32 %v73, 7
    %v75 = vsub.s32 0, %v74
    %v76 = vrot.slane %v30, %v75
    %vm78 = vcmask 261120
    %v80 = vsel %vm78, %v36, 0
    %v83 = vsel %vm78, %v37, 0
    %v86 = vsel %vm78, %v38, 0
    %v89 = vsel %vm78, %v39, 0
    %v92 = vsel %vm78, %v40, 0
    %v95 = vsel %vm78, %v41, 0
    %v98 = vsel %vm78, %v42, 0
    %v101 = vsel %vm78, %v43, 0
    %v104 = vsel %vm78, %v44, 0
    %v107 = vsel %vm78, %v45, 0
    %v110 = vsel %vm78, %v46, 0
    %v113 = vsel %vm78, %v47, 0
    %v116 = vsel %vm78, %v48, 0
    %v119 = vsel %vm78, %v49, 0
    %v122 = vsel %vm78, %v50, 0
    %v125 = vsel %vm78, %v51, 0
    %v128 = vsel %vm78, %v52, 0
    %v131 = vsel %vm78, %v53, 0
    %v134 = vsel %vm78, %v54, 0
    %v137 = vsel %vm78, %v55, 0
    %v140 = vsel %vm78, %v56, 0
    %v143 = vsel %vm78, %v57, 0
    %v146 = vsel %vm78, %v58, 0
    %v149 = vsel %vm78, %v59, 0
    %v152 = vsel %vm78, %v60, 0
    %v155 = vsel %vm78, %v61, 0
    %v158 = vsel %vm78, %v62, 0
    %v161 = vsel %vm78, %v63, 0
    %v164 = vsel %vm78, %v64, 0
    %v167 = vsel %vm78, %v65, 0
    %v170 = vsel %vm78, %v66, 0
    %v173 = vsel %vm78, %v67, 0
    %175 = vmatprep.subr.mxu0 0.0
    %176 = vmatpush1.msra.mxu0 %v68
    %177 = vmatprep.subr.mxu0 0.0
    %178 = vmatpush1.msra.mxu0 %v69
    %179 = vmatprep.subr.mxu0 0.0
    %180 = vmatpush1.msra.mxu0 %v70
    %181 = vmatprep.subr.mxu0 0.0
    %182 = vmatpush1.msra.mxu0 %v71
    %183 = vmatprep.subr.mxu0 0.0
    %184 = vmatpush1.msra.mxu0 0.0
    %185 = vmatprep.subr.mxu0 0.0
    %186 = vmatpush1.msra.mxu0 0.0
    %187 = vmatprep.subr.mxu0 0.0
    %188 = vmatpush1.msra.mxu0 0.0
    %189 = vmatprep.subr.mxu0 0.0
    %190 = vmatpush1.msra.mxu0 0.0
    %191 = vmatprep.subr.mxu0 0.0
    %192 = vmatpush1.msra.mxu0 0.0
    %193 = vmatprep.subr.mxu0 0.0
    %194 = vmatpush1.msra.mxu0 0.0
    %195 = vmatprep.subr.mxu0 0.0
    %196 = vmatpush1.msra.mxu0 0.0
    %197 = vmatprep.subr.mxu0 0.0
    %198 = vmatpush1.msra.mxu0 0.0
    %199 = vmatprep.subr.mxu0 0.0
    %200 = vmatpush1.msra.mxu0 0.0
    %201 = vmatprep.subr.mxu0 0.0
    %202 = vmatpush1.msra.mxu0 0.0
    %203 = vmatprep.subr.mxu0 0.0
    %204 = vmatpush1.msra.mxu0 0.0
    %205 = vmatprep.subr.mxu0 0.0
    %206 = vmatpush1.msra.mxu0 0.0
    %207 = vmatprep.subr.mxu0 0.0
    %208 = vmatpush1.msra.mxu0 0.0
    %209 = vmatprep.subr.mxu0 0.0
    %210 = vmatpush1.msra.mxu0 0.0
    %211 = vmatprep.subr.mxu0 0.0
    %212 = vmatpush1.msra.mxu0 0.0
    %213 = vmatprep.subr.mxu0 0.0
    %214 = vmatpush1.msra.mxu0 0.0
    %215 = vmatprep.subr.mxu0 0.0
    %216 = vmatpush1.msra.mxu0 0.0
    %217 = vmatprep.subr.mxu0 0.0
    %218 = vmatpush1.msra.mxu0 0.0
    %219 = vmatprep.subr.mxu0 0.0
    %220 = vmatpush1.msra.mxu0 0.0
    %221 = vmatprep.subr.mxu0 0.0
    %222 = vmatpush1.msra.mxu0 0.0
    %223 = vmatprep.subr.mxu0 0.0
    %224 = vmatpush1.msra.mxu0 0.0
    %225 = vmatprep.subr.mxu0 0.0
    %226 = vmatpush1.msra.mxu0 0.0
    %227 = vmatprep.subr.mxu0 0.0
    %228 = vmatpush1.msra.mxu0 0.0
    %229 = vmatprep.subr.mxu0 0.0
    %230 = vmatpush1.msra.mxu0 0.0
    %231 = vmatprep.subr.mxu0 0.0
    %232 = vmatpush1.msra.mxu0 0.0
    %233 = vmatprep.subr.mxu0 0.0
    %234 = vmatpush1.msra.mxu0 0.0
    %235 = vmatprep.subr.mxu0 0.0
    %236 = vmatpush1.msra.mxu0 0.0
    %237 = vmatprep.subr.mxu0 0.0
    %238 = vmatpush1.msra.mxu0 0.0
    %239 = vmatprep.mubr.f32.mxu0 0.0
    %240 = vmatmul.mubr.f32.gmra.mrb[0].mxu0 %v80
    %v241 = vpop.f32.mrb[0].mxu0
    %v242 = vadd.f32 %v76, %v241
    %v243 = vpop.f32.mrb[0].mxu0
    %244 = vmatprep.mubr.f32.mxu0 0.0
    %245 = vmatmul.mubr.f32.gmra.mrb[0].mxu0 %v83
    %v246 = vpop.f32.mrb[0].mxu0
    %v247 = vadd.f32 %v76, %v246
    %v248 = vpop.f32.mrb[0].mxu0
    %249 = vmatprep.mubr.f32.mxu0 0.0
    %250 = vmatmul.mubr.f32.gmra.mrb[0].mxu0 %v86
    %v251 = vpop.f32.mrb[0].mxu0
    %v252 = vadd.f32 %v76, %v251
    %v253 = vpop.f32.mrb[0].mxu0
    %254 = vmatprep.mubr.f32.mxu0 0.0
    %255 = vmatmul.mubr.f32.gmra.mrb[0].mxu0 %v89
    %v256 = vpop.f32.mrb[0].mxu0
    %v257 = vadd.f32 %v76, %v256
    %v258 = vpop.f32.mrb[0].mxu0
    %259 = vmatprep.mubr.f32.mxu0 0.0
    %260 = vmatmul.mubr.f32.gmra.mrb[0].mxu0 %v92
    %v261 = vpop.f32.mrb[0].mxu0
    %v262 = vadd.f32 %v76, %v261
    %v263 = vpop.f32.mrb[0].mxu0
    %264 = vmatprep.mubr.f32.mxu0 0.0
    %265 = vmatmul.mubr.f32.gmra.mrb[0].mxu0 %v95
    %v266 = vpop.f32.mrb[0].mxu0
    %v267 = vadd.f32 %v76, %v266
    %v268 = vpop.f32.mrb[0].mxu0
    %269 = vmatprep.mubr.f32.mxu0 0.0
    %270 = vmatmul.mubr.f32.gmra.mrb[0].mxu0 %v98
    %v271 = vpop.f32.mrb[0].mxu0
    %v272 = vadd.f32 %v76, %v271
    %v273 = vpop.f32.mrb[0].mxu0
    %274 = vmatprep.mubr.f32.mxu0 0.0
    %275 = vmatmul.mubr.f32.gmra.mrb[0].mxu0 %v101
    %v276 = vpop.f32.mrb[0].mxu0
    %v277 = vadd.f32 %v76, %v276
    %v278 = vpop.f32.mrb[0].mxu0
    %279 = vmatprep.mubr.f32.mxu0 0.0
    %280 = vmatmul.mubr.f32.gmra.mrb[0].mxu0 %v104
    %v281 = vpop.f32.mrb[0].mxu0
    %v282 = vadd.f32 %v76, %v281
    %v283 = vpop.f32.mrb[0].mxu0
    %284 = vmatprep.mubr.f32.mxu0 0.0
    %285 = vmatmul.mubr.f32.gmra.mrb[0].mxu0 %v107
    %v286 = vpop.f32.mrb[0].mxu0
    %v287 = vadd.f32 %v76, %v286
    %v288 = vpop.f32.mrb[0].mxu0
    %289 = vmatprep.mubr.f32.mxu0 0.0
    %290 = vmatmul.mubr.f32.gmra.mrb[0].mxu0 %v110
    %v291 = vpop.f32.mrb[0].mxu0
    %v292 = vadd.f32 %v76, %v291
    %v293 = vpop.f32.mrb[0].mxu0
    %294 = vmatprep.mubr.f32.mxu0 0.0
    %295 = vmatmul.mubr.f32.gmra.mrb[0].mxu0 %v113
    %v296 = vpop.f32.mrb[0].mxu0
    %v297 = vadd.f32 %v76, %v296
    %v298 = vpop.f32.mrb[0].mxu0
    %299 = vmatprep.mubr.f32.mxu0 0.0
    %300 = vmatmul.mubr.f32.gmra.mrb[0].mxu0 %v116
    %v301 = vpop.f32.mrb[0].mxu0
    %v302 = vadd.f32 %v76, %v301
    %v303 = vpop.f32.mrb[0].mxu0
    %304 = vmatprep.mubr.f32.mxu0 0.0
    %305 = vmatmul.mubr.f32.gmra.mrb[0].mxu0 %v119
    %v306 = vpop.f32.mrb[0].mxu0
    %v307 = vadd.f32 %v76, %v306
    %v308 = vpop.f32.mrb[0].mxu0
    %309 = vmatprep.mubr.f32.mxu0 0.0
    %310 = vmatmul.mubr.f32.gmra.mrb[0].mxu0 %v122
    %v311 = vpop.f32.mrb[0].mxu0
    %v312 = vadd.f32 %v76, %v311
    %v313 = vpop.f32.mrb[0].mxu0
    %314 = vmatprep.mubr.f32.mxu0 0.0
    %315 = vmatmul.mubr.f32.gmra.mrb[0].mxu0 %v125
    %v316 = vpop.f32.mrb[0].mxu0
    %v317 = vadd.f32 %v76, %v316
    %v318 = vpop.f32.mrb[0].mxu0
    %319 = vmatprep.mubr.f32.mxu0 0.0
    %320 = vmatmul.mubr.f32.gmra.mrb[0].mxu0 %v128
    %v321 = vpop.f32.mrb[0].mxu0
    %v322 = vadd.f32 %v76, %v321
    %v323 = vpop.f32.mrb[0].mxu0
    %324 = vmatprep.mubr.f32.mxu0 0.0
    %325 = vmatmul.mubr.f32.gmra.mrb[0].mxu0 %v131
    %v326 = vpop.f32.mrb[0].mxu0
    %v327 = vadd.f32 %v76, %v326
    %v328 = vpop.f32.mrb[0].mxu0
    %329 = vmatprep.mubr.f32.mxu0 0.0
    %330 = vmatmul.mubr.f32.gmra.mrb[0].mxu0 %v134
    %v331 = vpop.f32.mrb[0].mxu0
    %v332 = vadd.f32 %v76, %v331
    %v333 = vpop.f32.mrb[0].mxu0
    %334 = vmatprep.mubr.f32.mxu0 0.0
    %335 = vmatmul.mubr.f32.gmra.mrb[0].mxu0 %v137
    %v336 = vpop.f32.mrb[0].mxu0
    %v337 = vadd.f32 %v76, %v336
    %v338 = vpop.f32.mrb[0].mxu0
    %339 = vmatprep.mubr.f32.mxu0 0.0
    %340 = vmatmul.mubr.f32.gmra.mrb[0].mxu0 %v140
    %v341 = vpop.f32.mrb[0].mxu0
    %v342 = vadd.f32 %v76, %v341
    %v343 = vpop.f32.mrb[0].mxu0
    %344 = vmatprep.mubr.f32.mxu0 0.0
    %345 = vmatmul.mubr.f32.gmra.mrb[0].mxu0 %v143
    %v346 = vpop.f32.mrb[0].mxu0
    %v347 = vadd.f32 %v76, %v346
    %v348 = vpop.f32.mrb[0].mxu0
    %349 = vmatprep.mubr.f32.mxu0 0.0
    %350 = vmatmul.mubr.f32.gmra.mrb[0].mxu0 %v146
    %v351 = vpop.f32.mrb[0].mxu0
    %v352 = vadd.f32 %v76, %v351
    %v353 = vpop.f32.mrb[0].mxu0
    %354 = vmatprep.mubr.f32.mxu0 0.0
    %355 = vmatmul.mubr.f32.gmra.mrb[0].mxu0 %v149
    %v356 = vpop.f32.mrb[0].mxu0
    %v357 = vadd.f32 %v76, %v356
    %v358 = vpop.f32.mrb[0].mxu0
    %359 = vmatprep.mubr.f32.mxu0 0.0
    %360 = vmatmul.mubr.f32.gmra.mrb[0].mxu0 %v152
    %v361 = vpop.f32.mrb[0].mxu0
    %v362 = vadd.f32 %v76, %v361
    %v363 = vpop.f32.mrb[0].mxu0
    %364 = vmatprep.mubr.f32.mxu0 0.0
    %365 = vmatmul.mubr.f32.gmra.mrb[0].mxu0 %v155
    %v366 = vpop.f32.mrb[0].mxu0
    %v367 = vadd.f32 %v76, %v366
    %v368 = vpop.f32.mrb[0].mxu0
    %369 = vmatprep.mubr.f32.mxu0 0.0
    %370 = vmatmul.mubr.f32.gmra.mrb[0].mxu0 %v158
    %v371 = vpop.f32.mrb[0].mxu0
    %v372 = vadd.f32 %v76, %v371
    %v373 = vpop.f32.mrb[0].mxu0
    %374 = vmatprep.mubr.f32.mxu0 0.0
    %375 = vmatmul.mubr.f32.gmra.mrb[0].mxu0 %v161
    %v376 = vpop.f32.mrb[0].mxu0
    %v377 = vadd.f32 %v76, %v376
    %v378 = vpop.f32.mrb[0].mxu0
    %379 = vmatprep.mubr.f32.mxu0 0.0
    %380 = vmatmul.mubr.f32.gmra.mrb[0].mxu0 %v164
    %v381 = vpop.f32.mrb[0].mxu0
    %v382 = vadd.f32 %v76, %v381
    %v383 = vpop.f32.mrb[0].mxu0
    %384 = vmatprep.mubr.f32.mxu0 0.0
    %385 = vmatmul.mubr.f32.gmra.mrb[0].mxu0 %v167
    %v386 = vpop.f32.mrb[0].mxu0
    %v387 = vadd.f32 %v76, %v386
    %v388 = vpop.f32.mrb[0].mxu0
    %389 = vmatprep.mubr.f32.mxu0 0.0
    %390 = vmatmul.mubr.f32.gmra.mrb[0].mxu0 %v170
    %v391 = vpop.f32.mrb[0].mxu0
    %v392 = vadd.f32 %v76, %v391
    %v393 = vpop.f32.mrb[0].mxu0
    %394 = vmatprep.mubr.f32.mxu0 0.0
    %395 = vmatmul.mubr.f32.gmra.mrb[0].mxu0 %v173
    %v396 = vpop.f32.mrb[0].mxu0
    %v397 = vadd.f32 %v76, %v396
    %v398 = vpop.f32.mrb[0].mxu0
    %399 = vdwg.mxu0
    %v400 = vtanh.pop %v242
    %v401 = vtanh.pop %v247
    %v402 = vtanh.pop %v252
    %v403 = vtanh.pop %v257
    %v404 = vtanh.pop %v262
    %v405 = vtanh.pop %v267
    %v406 = vtanh.pop %v272
    %v407 = vtanh.pop %v277
    %v408 = vtanh.pop %v282
    %v409 = vtanh.pop %v287
    %v410 = vtanh.pop %v292
    %v411 = vtanh.pop %v297
    %v412 = vtanh.pop %v302
    %v413 = vtanh.pop %v307
    %v414 = vtanh.pop %v312
    %v415 = vtanh.pop %v317
    %v416 = vtanh.pop %v322
    %v417 = vtanh.pop %v327
    %v418 = vtanh.pop %v332
    %v419 = vtanh.pop %v337
    %v420 = vtanh.pop %v342
    %v421 = vtanh.pop %v347
    %v422 = vtanh.pop %v352
    %v423 = vtanh.pop %v357
    %v424 = vtanh.pop %v362
    %v425 = vtanh.pop %v367
    %v426 = vtanh.pop %v372
    %v427 = vtanh.pop %v377
    %v428 = vtanh.pop %v382
    %v429 = vtanh.pop %v387
    %v430 = vtanh.pop %v392
    %v431 = vtanh.pop %v397
    %v432 = vld [vmem:[%s2] sm:$0xff]
    %v433 = vld [vmem:[%s2 + $0x8] sm:$0xff]
    %v434 = vld [vmem:[%s2 + $0x10] sm:$0xff]
    %v435 = vld [vmem:[%s2 + $0x18] sm:$0xff]
    %v437 = vlaneseq
    %v438 = vshrl.u32 %v437, 7
    %v439 = vsub.s32 0, %v438
    %v440 = vrot.slane %v31, %v439
    %v443 = vsel %vm78, %v400, 0
    %v446 = vsel %vm78, %v401, 0
    %v449 = vsel %vm78, %v402, 0
    %v452 = vsel %vm78, %v403, 0
    %v455 = vsel %vm78, %v404, 0
    %v458 = vsel %vm78, %v405, 0
    %v461 = vsel %vm78, %v406, 0
    %v464 = vsel %vm78, %v407, 0
    %v467 = vsel %vm78, %v408, 0
    %v470 = vsel %vm78, %v409, 0
    %v473 = vsel %vm78, %v410, 0
    %v476 = vsel %vm78, %v411, 0
    %v479 = vsel %vm78, %v412, 0
    %v482 = vsel %vm78, %v413, 0
    %v485 = vsel %vm78, %v414, 0
    %v488 = vsel %vm78, %v415, 0
    %v491 = vsel %vm78, %v416, 0
    %v494 = vsel %vm78, %v417, 0
    %v497 = vsel %vm78, %v418, 0
    %v500 = vsel %vm78, %v419, 0
    %v503 = vsel %vm78, %v420, 0
    %v506 = vsel %vm78, %v421, 0
    %v509 = vsel %vm78, %v422, 0
    %v512 = vsel %vm78, %v423, 0
    %v515 = vsel %vm78, %v424, 0
    %v518 = vsel %vm78, %v425, 0
    %v521 = vsel %vm78, %v426, 0
    %v524 = vsel %vm78, %v427, 0
    %v527 = vsel %vm78, %v428, 0
    %v530 = vsel %vm78, %v429, 0
    %v533 = vsel %vm78, %v430, 0
    %v536 = vsel %vm78, %v431, 0
    %538 = vmatprep.subr.mxu0 0.0
    %539 = vmatpush1.msra.mxu0 %v432
    %540 = vmatprep.subr.mxu0 0.0
    %541 = vmatpush1.msra.mxu0 %v433
    %542 = vmatprep.subr.mxu0 0.0
    %543 = vmatpush1.msra.mxu0 %v434
    %544 = vmatprep.subr.mxu0 0.0
    %545 = vmatpush1.msra.mxu0 %v435
    %546 = vmatprep.subr.mxu0 0.0
    %547 = vmatpush1.msra.mxu0 0.0
    %548 = vmatprep.subr.mxu0 0.0
    %549 = vmatpush1.msra.mxu0 0.0
    %550 = vmatprep.subr.mxu0 0.0
    %551 = vmatpush1.msra.mxu0 0.0
    %552 = vmatprep.subr.mxu0 0.0
    %553 = vmatpush1.msra.mxu0 0.0
    %554 = vmatprep.subr.mxu0 0.0
    %555 = vmatpush1.msra.mxu0 0.0
    %556 = vmatprep.subr.mxu0 0.0
    %557 = vmatpush1.msra.mxu0 0.0
    %558 = vmatprep.subr.mxu0 0.0
    %559 = vmatpush1.msra.mxu0 0.0
    %560 = vmatprep.subr.mxu0 0.0
    %561 = vmatpush1.msra.mxu0 0.0
    %562 = vmatprep.subr.mxu0 0.0
    %563 = vmatpush1.msra.mxu0 0.0
    %564 = vmatprep.subr.mxu0 0.0
    %565 = vmatpush1.msra.mxu0 0.0
    %566 = vmatprep.subr.mxu0 0.0
    %567 = vmatpush1.msra.mxu0 0.0
    %568 = vmatprep.subr.mxu0 0.0
    %569 = vmatpush1.msra.mxu0 0.0
    %570 = vmatprep.subr.mxu0 0.0
    %571 = vmatpush1.msra.mxu0 0.0
    %572 = vmatprep.subr.mxu0 0.0
    %573 = vmatpush1.msra.mxu0 0.0
    %574 = vmatprep.subr.mxu0 0.0
    %575 = vmatpush1.msra.mxu0 0.0
    %576 = vmatprep.subr.mxu0 0.0
    %577 = vmatpush1.msra.mxu0 0.0
    %578 = vmatprep.subr.mxu0 0.0
    %579 = vmatpush1.msra.mxu0 0.0
    %580 = vmatprep.subr.mxu0 0.0
    %581 = vmatpush1.msra.mxu0 0.0
    %582 = vmatprep.subr.mxu0 0.0
    %583 = vmatpush1.msra.mxu0 0.0
    %584 = vmatprep.subr.mxu0 0.0
    %585 = vmatpush1.msra.mxu0 0.0
    %586 = vmatprep.subr.mxu0 0.0
    %587 = vmatpush1.msra.mxu0 0.0
    %588 = vmatprep.subr.mxu0 0.0
    %589 = vmatpush1.msra.mxu0 0.0
    %590 = vmatprep.subr.mxu0 0.0
    %591 = vmatpush1.msra.mxu0 0.0
    %592 = vmatprep.subr.mxu0 0.0
    %593 = vmatpush1.msra.mxu0 0.0
    %594 = vmatprep.subr.mxu0 0.0
    %595 = vmatpush1.msra.mxu0 0.0
    %596 = vmatprep.subr.mxu0 0.0
    %597 = vmatpush1.msra.mxu0 0.0
    %598 = vmatprep.subr.mxu0 0.0
    %599 = vmatpush1.msra.mxu0 0.0
    %600 = vmatprep.subr.mxu0 0.0
    %601 = vmatpush1.msra.mxu0 0.0
    %602 = vmatprep.mubr.f32.mxu0 0.0
    %603 = vmatmul.mubr.f32.gmra.mrb[0].mxu0 %v443
    %v604 = vpop.f32.mrb[0].mxu0
    %v605 = vadd.f32 %v440, %v604
    %v606 = vpop.f32.mrb[0].mxu0
    %607 = vmatprep.mubr.f32.mxu0 0.0
    %608 = vmatmul.mubr.f32.gmra.mrb[0].mxu0 %v446
    %v609 = vpop.f32.mrb[0].mxu0
    %v610 = vadd.f32 %v440, %v609
    %v611 = vpop.f32.mrb[0].mxu0
    %612 = vmatprep.mubr.f32.mxu0 0.0
    %613 = vmatmul.mubr.f32.gmra.mrb[0].mxu0 %v449
    %v614 = vpop.f32.mrb[0].mxu0
    %v615 = vadd.f32 %v440, %v614
    %v616 = vpop.f32.mrb[0].mxu0
    %617 = vmatprep.mubr.f32.mxu0 0.0
    %618 = vmatmul.mubr.f32.gmra.mrb[0].mxu0 %v452
    %v619 = vpop.f32.mrb[0].mxu0
    %v620 = vadd.f32 %v440, %v619
    %v621 = vpop.f32.mrb[0].mxu0
    %622 = vmatprep.mubr.f32.mxu0 0.0
    %623 = vmatmul.mubr.f32.gmra.mrb[0].mxu0 %v455
    %v624 = vpop.f32.mrb[0].mxu0
    %v625 = vadd.f32 %v440, %v624
    %v626 = vpop.f32.mrb[0].mxu0
    %627 = vmatprep.mubr.f32.mxu0 0.0
    %628 = vmatmul.mubr.f32.gmra.mrb[0].mxu0 %v458
    %v629 = vpop.f32.mrb[0].mxu0
    %v630 = vadd.f32 %v440, %v629
    %v631 = vpop.f32.mrb[0].mxu0
    %632 = vmatprep.mubr.f32.mxu0 0.0
    %633 = vmatmul.mubr.f32.gmra.mrb[0].mxu0 %v461
    %v634 = vpop.f32.mrb[0].mxu0
    %v635 = vadd.f32 %v440, %v634
    %v636 = vpop.f32.mrb[0].mxu0
    %637 = vmatprep.mubr.f32.mxu0 0.0
    %638 = vmatmul.mubr.f32.gmra.mrb[0].mxu0 %v464
    %v639 = vpop.f32.mrb[0].mxu0
    %v640 = vadd.f32 %v440, %v639
    %v641 = vpop.f32.mrb[0].mxu0
    %642 = vmatprep.mubr.f32.mxu0 0.0
    %643 = vmatmul.mubr.f32.gmra.mrb[0].mxu0 %v467
    %v644 = vpop.f32.mrb[0].mxu0
    %v645 = vadd.f32 %v440, %v644
    %v646 = vpop.f32.mrb[0].mxu0
    %647 = vmatprep.mubr.f32.mxu0 0.0
    %648 = vmatmul.mubr.f32.gmra.mrb[0].mxu0 %v470
    %v649 = vpop.f32.mrb[0].mxu0
    %v650 = vadd.f32 %v440, %v649
    %v651 = vpop.f32.mrb[0].mxu0
    %652 = vmatprep.mubr.f32.mxu0 0.0
    %653 = vmatmul.mubr.f32.gmra.mrb[0].mxu0 %v473
    %v654 = vpop.f32.mrb[0].mxu0
    %v655 = vadd.f32 %v440, %v654
    %v656 = vpop.f32.mrb[0].mxu0
    %657 = vmatprep.mubr.f32.mxu0 0.0
    %658 = vmatmul.mubr.f32.gmra.mrb[0].mxu0 %v476
    %v659 = vpop.f32.mrb[0].mxu0
    %v660 = vadd.f32 %v440, %v659
    %v661 = vpop.f32.mrb[0].mxu0
    %662 = vmatprep.mubr.f32.mxu0 0.0
    %663 = vmatmul.mubr.f32.gmra.mrb[0].mxu0 %v479
    %v664 = vpop.f32.mrb[0].mxu0
    %v665 = vadd.f32 %v440, %v664
    %v666 = vpop.f32.mrb[0].mxu0
    %667 = vmatprep.mubr.f32.mxu0 0.0
    %668 = vmatmul.mubr.f32.gmra.mrb[0].mxu0 %v482
    %v669 = vpop.f32.mrb[0].mxu0
    %v670 = vadd.f32 %v440, %v669
    %v671 = vpop.f32.mrb[0].mxu0
    %672 = vmatprep.mubr.f32.mxu0 0.0
    %673 = vmatmul.mubr.f32.gmra.mrb[0].mxu0 %v485
    %v674 = vpop.f32.mrb[0].mxu0
    %v675 = vadd.f32 %v440, %v674
    %v676 = vpop.f32.mrb[0].mxu0
    %677 = vmatprep.mubr.f32.mxu0 0.0
    %678 = vmatmul.mubr.f32.gmra.mrb[0].mxu0 %v488
    %v679 = vpop.f32.mrb[0].mxu0
    %v680 = vadd.f32 %v440, %v679
    %v681 = vpop.f32.mrb[0].mxu0
    %682 = vmatprep.mubr.f32.mxu0 0.0
    %683 = vmatmul.mubr.f32.gmra.mrb[0].mxu0 %v491
    %v684 = vpop.f32.mrb[0].mxu0
    %v685 = vadd.f32 %v440, %v684
    %v686 = vpop.f32.mrb[0].mxu0
    %687 = vmatprep.mubr.f32.mxu0 0.0
    %688 = vmatmul.mubr.f32.gmra.mrb[0].mxu0 %v494
    %v689 = vpop.f32.mrb[0].mxu0
    %v690 = vadd.f32 %v440, %v689
    %v691 = vpop.f32.mrb[0].mxu0
    %692 = vmatprep.mubr.f32.mxu0 0.0
    %693 = vmatmul.mubr.f32.gmra.mrb[0].mxu0 %v497
    %v694 = vpop.f32.mrb[0].mxu0
    %v695 = vadd.f32 %v440, %v694
    %v696 = vpop.f32.mrb[0].mxu0
    %697 = vmatprep.mubr.f32.mxu0 0.0
    %698 = vmatmul.mubr.f32.gmra.mrb[0].mxu0 %v500
    %v699 = vpop.f32.mrb[0].mxu0
    %v700 = vadd.f32 %v440, %v699
    %v701 = vpop.f32.mrb[0].mxu0
    %702 = vmatprep.mubr.f32.mxu0 0.0
    %703 = vmatmul.mubr.f32.gmra.mrb[0].mxu0 %v503
    %v704 = vpop.f32.mrb[0].mxu0
    %v705 = vadd.f32 %v440, %v704
    %v706 = vpop.f32.mrb[0].mxu0
    %707 = vmatprep.mubr.f32.mxu0 0.0
    %708 = vmatmul.mubr.f32.gmra.mrb[0].mxu0 %v506
    %v709 = vpop.f32.mrb[0].mxu0
    %v710 = vadd.f32 %v440, %v709
    %v711 = vpop.f32.mrb[0].mxu0
    %712 = vmatprep.mubr.f32.mxu0 0.0
    %713 = vmatmul.mubr.f32.gmra.mrb[0].mxu0 %v509
    %v714 = vpop.f32.mrb[0].mxu0
    %v715 = vadd.f32 %v440, %v714
    %v716 = vpop.f32.mrb[0].mxu0
    %717 = vmatprep.mubr.f32.mxu0 0.0
    %718 = vmatmul.mubr.f32.gmra.mrb[0].mxu0 %v512
    %v719 = vpop.f32.mrb[0].mxu0
    %v720 = vadd.f32 %v440, %v719
    %v721 = vpop.f32.mrb[0].mxu0
    %722 = vmatprep.mubr.f32.mxu0 0.0
    %723 = vmatmul.mubr.f32.gmra.mrb[0].mxu0 %v515
    %v724 = vpop.f32.mrb[0].mxu0
    %v725 = vadd.f32 %v440, %v724
    %v726 = vpop.f32.mrb[0].mxu0
    %727 = vmatprep.mubr.f32.mxu0 0.0
    %728 = vmatmul.mubr.f32.gmra.mrb[0].mxu0 %v518
    %v729 = vpop.f32.mrb[0].mxu0
    %v730 = vadd.f32 %v440, %v729
    %v731 = vpop.f32.mrb[0].mxu0
    %732 = vmatprep.mubr.f32.mxu0 0.0
    %733 = vmatmul.mubr.f32.gmra.mrb[0].mxu0 %v521
    %v734 = vpop.f32.mrb[0].mxu0
    %v735 = vadd.f32 %v440, %v734
    %v736 = vpop.f32.mrb[0].mxu0
    %737 = vmatprep.mubr.f32.mxu0 0.0
    %738 = vmatmul.mubr.f32.gmra.mrb[0].mxu0 %v524
    %v739 = vpop.f32.mrb[0].mxu0
    %v740 = vadd.f32 %v440, %v739
    %v741 = vpop.f32.mrb[0].mxu0
    %742 = vmatprep.mubr.f32.mxu0 0.0
    %743 = vmatmul.mubr.f32.gmra.mrb[0].mxu0 %v527
    %v744 = vpop.f32.mrb[0].mxu0
    %v745 = vadd.f32 %v440, %v744
    %v746 = vpop.f32.mrb[0].mxu0
    %747 = vmatprep.mubr.f32.mxu0 0.0
    %748 = vmatmul.mubr.f32.gmra.mrb[0].mxu0 %v530
    %v749 = vpop.f32.mrb[0].mxu0
    %v750 = vadd.f32 %v440, %v749
    %v751 = vpop.f32.mrb[0].mxu0
    %752 = vmatprep.mubr.f32.mxu0 0.0
    %753 = vmatmul.mubr.f32.gmra.mrb[0].mxu0 %v533
    %v754 = vpop.f32.mrb[0].mxu0
    %v755 = vadd.f32 %v440, %v754
    %v756 = vpop.f32.mrb[0].mxu0
    %757 = vmatprep.mubr.f32.mxu0 0.0
    %758 = vmatmul.mubr.f32.gmra.mrb[0].mxu0 %v536
    %v759 = vpop.f32.mrb[0].mxu0
    %v760 = vadd.f32 %v440, %v759
    %v761 = vpop.f32.mrb[0].mxu0
    %762 = vdwg.mxu0
    %v763 = vtanh.pop %v605
    %v764 = vtanh.pop %v610
    %v765 = vtanh.pop %v615
    %v766 = vtanh.pop %v620
    %v767 = vtanh.pop %v625
    %v768 = vtanh.pop %v630
    %v769 = vtanh.pop %v635
    %v770 = vtanh.pop %v640
    %v771 = vtanh.pop %v645
    %v772 = vtanh.pop %v650
    %v773 = vtanh.pop %v655
    %v774 = vtanh.pop %v660
    %v775 = vtanh.pop %v665
    %v776 = vtanh.pop %v670
    %v777 = vtanh.pop %v675
    %v778 = vtanh.pop %v680
    %v779 = vtanh.pop %v685
    %v780 = vtanh.pop %v690
    %v781 = vtanh.pop %v695
    %v782 = vtanh.pop %v700
    %v783 = vtanh.pop %v705
    %v784 = vtanh.pop %v710
    %v785 = vtanh.pop %v715
    %v786 = vtanh.pop %v720
    %v787 = vtanh.pop %v725
    %v788 = vtanh.pop %v730
    %v789 = vtanh.pop %v735
    %v790 = vtanh.pop %v740
    %v791 = vtanh.pop %v745
    %v792 = vtanh.pop %v750
    %v793 = vtanh.pop %v755
    %v794 = vtanh.pop %v760
    %v795 = vld [vmem:[%s3] sm:$0xff]
    %v796 = vld [vmem:[%s3 + $0x8] sm:$0xff]
    %v797 = vld [vmem:[%s3 + $0x10] sm:$0xff]
    %v798 = vld [vmem:[%s3 + $0x18] sm:$0xff]
    %v800 = vlaneseq
    %v801 = vshrl.u32 %v800, 7
    %v802 = vsub.s32 0, %v801
    %v803 = vrot.slane %v32, %v802
    %v806 = vsel %vm78, %v763, 0
    %v809 = vsel %vm78, %v764, 0
    %v812 = vsel %vm78, %v765, 0
    %v815 = vsel %vm78, %v766, 0
    %v818 = vsel %vm78, %v767, 0
    %v821 = vsel %vm78, %v768, 0
    %v824 = vsel %vm78, %v769, 0
    %v827 = vsel %vm78, %v770, 0
    %v830 = vsel %vm78, %v771, 0
    %v833 = vsel %vm78, %v772, 0
    %v836 = vsel %vm78, %v773, 0
    %v839 = vsel %vm78, %v774, 0
    %v842 = vsel %vm78, %v775, 0
    %v845 = vsel %vm78, %v776, 0
    %v848 = vsel %vm78, %v777, 0
    %v851 = vsel %vm78, %v778, 0
    %v854 = vsel %vm78, %v779, 0
    %v857 = vsel %vm78, %v780, 0
    %v860 = vsel %vm78, %v781, 0
    %v863 = vsel %vm78, %v782, 0
    %v866 = vsel %vm78, %v783, 0
    %v869 = vsel %vm78, %v784, 0
    %v872 = vsel %vm78, %v785, 0
    %v875 = vsel %vm78, %v786, 0
    %v878 = vsel %vm78, %v787, 0
    %v881 = vsel %vm78, %v788, 0
    %v884 = vsel %vm78, %v789, 0
    %v887 = vsel %vm78, %v790, 0
    %v890 = vsel %vm78, %v791, 0
    %v893 = vsel %vm78, %v792, 0
    %v896 = vsel %vm78, %v793, 0
    %v899 = vsel %vm78, %v794, 0
    %901 = vmatprep.subr.mxu0 0.0
    %902 = vmatpush1.msra.mxu0 %v795
    %903 = vmatprep.subr.mxu0 0.0
    %904 = vmatpush1.msra.mxu0 %v796
    %905 = vmatprep.subr.mxu0 0.0
    %906 = vmatpush1.msra.mxu0 %v797
    %907 = vmatprep.subr.mxu0 0.0
    %908 = vmatpush1.msra.mxu0 %v798
    %909 = vmatprep.subr.mxu0 0.0
    %910 = vmatpush1.msra.mxu0 0.0
    %911 = vmatprep.subr.mxu0 0.0
    %912 = vmatpush1.msra.mxu0 0.0
    %913 = vmatprep.subr.mxu0 0.0
    %914 = vmatpush1.msra.mxu0 0.0
    %915 = vmatprep.subr.mxu0 0.0
    %916 = vmatpush1.msra.mxu0 0.0
    %917 = vmatprep.subr.mxu0 0.0
    %918 = vmatpush1.msra.mxu0 0.0
    %919 = vmatprep.subr.mxu0 0.0
    %920 = vmatpush1.msra.mxu0 0.0
    %921 = vmatprep.subr.mxu0 0.0
    %922 = vmatpush1.msra.mxu0 0.0
    %923 = vmatprep.subr.mxu0 0.0
    %924 = vmatpush1.msra.mxu0 0.0
    %925 = vmatprep.subr.mxu0 0.0
    %926 = vmatpush1.msra.mxu0 0.0
    %927 = vmatprep.subr.mxu0 0.0
    %928 = vmatpush1.msra.mxu0 0.0
    %929 = vmatprep.subr.mxu0 0.0
    %930 = vmatpush1.msra.mxu0 0.0
    %931 = vmatprep.subr.mxu0 0.0
    %932 = vmatpush1.msra.mxu0 0.0
    %933 = vmatprep.subr.mxu0 0.0
    %934 = vmatpush1.msra.mxu0 0.0
    %935 = vmatprep.subr.mxu0 0.0
    %936 = vmatpush1.msra.mxu0 0.0
    %937 = vmatprep.subr.mxu0 0.0
    %938 = vmatpush1.msra.mxu0 0.0
    %939 = vmatprep.subr.mxu0 0.0
    %940 = vmatpush1.msra.mxu0 0.0
    %941 = vmatprep.subr.mxu0 0.0
    %942 = vmatpush1.msra.mxu0 0.0
    %943 = vmatprep.subr.mxu0 0.0
    %944 = vmatpush1.msra.mxu0 0.0
    %945 = vmatprep.subr.mxu0 0.0
    %946 = vmatpush1.msra.mxu0 0.0
    %947 = vmatprep.subr.mxu0 0.0
    %948 = vmatpush1.msra.mxu0 0.0
    %949 = vmatprep.subr.mxu0 0.0
    %950 = vmatpush1.msra.mxu0 0.0
    %951 = vmatprep.subr.mxu0 0.0
    %952 = vmatpush1.msra.mxu0 0.0
    %953 = vmatprep.subr.mxu0 0.0
    %954 = vmatpush1.msra.mxu0 0.0
    %955 = vmatprep.subr.mxu0 0.0
    %956 = vmatpush1.msra.mxu0 0.0
    %957 = vmatprep.subr.mxu0 0.0
    %958 = vmatpush1.msra.mxu0 0.0
    %959 = vmatprep.subr.mxu0 0.0
    %960 = vmatpush1.msra.mxu0 0.0
    %961 = vmatprep.subr.mxu0 0.0
    %962 = vmatpush1.msra.mxu0 0.0
    %963 = vmatprep.subr.mxu0 0.0
    %964 = vmatpush1.msra.mxu0 0.0
    %965 = vmatprep.mubr.f32.mxu0 0.0
    %966 = vmatmul.mubr.f32.gmra.mrb[0].mxu0 %v806
    %v967 = vpop.f32.mrb[0].mxu0
    %v968 = vadd.f32 %v803, %v967
    %v969 = vpop.f32.mrb[0].mxu0
    %970 = vmatprep.mubr.f32.mxu0 0.0
    %971 = vmatmul.mubr.f32.gmra.mrb[0].mxu0 %v809
    %v972 = vpop.f32.mrb[0].mxu0
    %v973 = vadd.f32 %v803, %v972
    %v974 = vpop.f32.mrb[0].mxu0
    %975 = vmatprep.mubr.f32.mxu0 0.0
    %976 = vmatmul.mubr.f32.gmra.mrb[0].mxu0 %v812
    %v977 = vpop.f32.mrb[0].mxu0
    %v978 = vadd.f32 %v803, %v977
    %v979 = vpop.f32.mrb[0].mxu0
    %980 = vmatprep.mubr.f32.mxu0 0.0
    %981 = vmatmul.mubr.f32.gmra.mrb[0].mxu0 %v815
    %v982 = vpop.f32.mrb[0].mxu0
    %v983 = vadd.f32 %v803, %v982
    %v984 = vpop.f32.mrb[0].mxu0
    %985 = vmatprep.mubr.f32.mxu0 0.0
    %986 = vmatmul.mubr.f32.gmra.mrb[0].mxu0 %v818
    %v987 = vpop.f32.mrb[0].mxu0
    %v988 = vadd.f32 %v803, %v987
    %v989 = vpop.f32.mrb[0].mxu0
    %990 = vmatprep.mubr.f32.mxu0 0.0
    %991 = vmatmul.mubr.f32.gmra.mrb[0].mxu0 %v821
    %v992 = vpop.f32.mrb[0].mxu0
    %v993 = vadd.f32 %v803, %v992
    %v994 = vpop.f32.mrb[0].mxu0
    %995 = vmatprep.mubr.f32.mxu0 0.0
    %996 = vmatmul.mubr.f32.gmra.mrb[0].mxu0 %v824
    %v997 = vpop.f32.mrb[0].mxu0
    %v998 = vadd.f32 %v803, %v997
    %v999 = vpop.f32.mrb[0].mxu0
    %1000 = vmatprep.mubr.f32.mxu0 0.0
    %1001 = vmatmul.mubr.f32.gmra.mrb[0].mxu0 %v827
    %v1002 = vpop.f32.mrb[0].mxu0
    %v1003 = vadd.f32 %v803, %v1002
    %v1004 = vpop.f32.mrb[0].mxu0
    %1005 = vmatprep.mubr.f32.mxu0 0.0
    %1006 = vmatmul.mubr.f32.gmra.mrb[0].mxu0 %v830
    %v1007 = vpop.f32.mrb[0].mxu0
    %v1008 = vadd.f32 %v803, %v1007
    %v1009 = vpop.f32.mrb[0].mxu0
    %1010 = vmatprep.mubr.f32.mxu0 0.0
    %1011 = vmatmul.mubr.f32.gmra.mrb[0].mxu0 %v833
    %v1012 = vpop.f32.mrb[0].mxu0
    %v1013 = vadd.f32 %v803, %v1012
    %v1014 = vpop.f32.mrb[0].mxu0
    %1015 = vmatprep.mubr.f32.mxu0 0.0
    %1016 = vmatmul.mubr.f32.gmra.mrb[0].mxu0 %v836
    %v1017 = vpop.f32.mrb[0].mxu0
    %v1018 = vadd.f32 %v803, %v1017
    %v1019 = vpop.f32.mrb[0].mxu0
    %1020 = vmatprep.mubr.f32.mxu0 0.0
    %1021 = vmatmul.mubr.f32.gmra.mrb[0].mxu0 %v839
    %v1022 = vpop.f32.mrb[0].mxu0
    %v1023 = vadd.f32 %v803, %v1022
    %v1024 = vpop.f32.mrb[0].mxu0
    %1025 = vmatprep.mubr.f32.mxu0 0.0
    %1026 = vmatmul.mubr.f32.gmra.mrb[0].mxu0 %v842
    %v1027 = vpop.f32.mrb[0].mxu0
    %v1028 = vadd.f32 %v803, %v1027
    %v1029 = vpop.f32.mrb[0].mxu0
    %1030 = vmatprep.mubr.f32.mxu0 0.0
    %1031 = vmatmul.mubr.f32.gmra.mrb[0].mxu0 %v845
    %v1032 = vpop.f32.mrb[0].mxu0
    %v1033 = vadd.f32 %v803, %v1032
    %v1034 = vpop.f32.mrb[0].mxu0
    %1035 = vmatprep.mubr.f32.mxu0 0.0
    %1036 = vmatmul.mubr.f32.gmra.mrb[0].mxu0 %v848
    %v1037 = vpop.f32.mrb[0].mxu0
    %v1038 = vadd.f32 %v803, %v1037
    %v1039 = vpop.f32.mrb[0].mxu0
    %1040 = vmatprep.mubr.f32.mxu0 0.0
    %1041 = vmatmul.mubr.f32.gmra.mrb[0].mxu0 %v851
    %v1042 = vpop.f32.mrb[0].mxu0
    %v1043 = vadd.f32 %v803, %v1042
    %v1044 = vpop.f32.mrb[0].mxu0
    %1045 = vmatprep.mubr.f32.mxu0 0.0
    %1046 = vmatmul.mubr.f32.gmra.mrb[0].mxu0 %v854
    %v1047 = vpop.f32.mrb[0].mxu0
    %v1048 = vadd.f32 %v803, %v1047
    %v1049 = vpop.f32.mrb[0].mxu0
    %1050 = vmatprep.mubr.f32.mxu0 0.0
    %1051 = vmatmul.mubr.f32.gmra.mrb[0].mxu0 %v857
    %v1052 = vpop.f32.mrb[0].mxu0
    %v1053 = vadd.f32 %v803, %v1052
    %v1054 = vpop.f32.mrb[0].mxu0
    %1055 = vmatprep.mubr.f32.mxu0 0.0
    %1056 = vmatmul.mubr.f32.gmra.mrb[0].mxu0 %v860
    %v1057 = vpop.f32.mrb[0].mxu0
    %v1058 = vadd.f32 %v803, %v1057
    %v1059 = vpop.f32.mrb[0].mxu0
    %1060 = vmatprep.mubr.f32.mxu0 0.0
    %1061 = vmatmul.mubr.f32.gmra.mrb[0].mxu0 %v863
    %v1062 = vpop.f32.mrb[0].mxu0
    %v1063 = vadd.f32 %v803, %v1062
    %v1064 = vpop.f32.mrb[0].mxu0
    %1065 = vmatprep.mubr.f32.mxu0 0.0
    %1066 = vmatmul.mubr.f32.gmra.mrb[0].mxu0 %v866
    %v1067 = vpop.f32.mrb[0].mxu0
    %v1068 = vadd.f32 %v803, %v1067
    %v1069 = vpop.f32.mrb[0].mxu0
    %1070 = vmatprep.mubr.f32.mxu0 0.0
    %1071 = vmatmul.mubr.f32.gmra.mrb[0].mxu0 %v869
    %v1072 = vpop.f32.mrb[0].mxu0
    %v1073 = vadd.f32 %v803, %v1072
    %v1074 = vpop.f32.mrb[0].mxu0
    %1075 = vmatprep.mubr.f32.mxu0 0.0
    %1076 = vmatmul.mubr.f32.gmra.mrb[0].mxu0 %v872
    %v1077 = vpop.f32.mrb[0].mxu0
    %v1078 = vadd.f32 %v803, %v1077
    %v1079 = vpop.f32.mrb[0].mxu0
    %1080 = vmatprep.mubr.f32.mxu0 0.0
    %1081 = vmatmul.mubr.f32.gmra.mrb[0].mxu0 %v875
    %v1082 = vpop.f32.mrb[0].mxu0
    %v1083 = vadd.f32 %v803, %v1082
    %v1084 = vpop.f32.mrb[0].mxu0
    %1085 = vmatprep.mubr.f32.mxu0 0.0
    %1086 = vmatmul.mubr.f32.gmra.mrb[0].mxu0 %v878
    %v1087 = vpop.f32.mrb[0].mxu0
    %v1088 = vadd.f32 %v803, %v1087
    %v1089 = vpop.f32.mrb[0].mxu0
    %1090 = vmatprep.mubr.f32.mxu0 0.0
    %1091 = vmatmul.mubr.f32.gmra.mrb[0].mxu0 %v881
    %v1092 = vpop.f32.mrb[0].mxu0
    %v1093 = vadd.f32 %v803, %v1092
    %v1094 = vpop.f32.mrb[0].mxu0
    %1095 = vmatprep.mubr.f32.mxu0 0.0
    %1096 = vmatmul.mubr.f32.gmra.mrb[0].mxu0 %v884
    %v1097 = vpop.f32.mrb[0].mxu0
    %v1098 = vadd.f32 %v803, %v1097
    %v1099 = vpop.f32.mrb[0].mxu0
    %1100 = vmatprep.mubr.f32.mxu0 0.0
    %1101 = vmatmul.mubr.f32.gmra.mrb[0].mxu0 %v887
    %v1102 = vpop.f32.mrb[0].mxu0
    %v1103 = vadd.f32 %v803, %v1102
    %v1104 = vpop.f32.mrb[0].mxu0
    %1105 = vmatprep.mubr.f32.mxu0 0.0
    %1106 = vmatmul.mubr.f32.gmra.mrb[0].mxu0 %v890
    %v1107 = vpop.f32.mrb[0].mxu0
    %v1108 = vadd.f32 %v803, %v1107
    %v1109 = vpop.f32.mrb[0].mxu0
    %1110 = vmatprep.mubr.f32.mxu0 0.0
    %1111 = vmatmul.mubr.f32.gmra.mrb[0].mxu0 %v893
    %v1112 = vpop.f32.mrb[0].mxu0
    %v1113 = vadd.f32 %v803, %v1112
    %v1114 = vpop.f32.mrb[0].mxu0
    %1115 = vmatprep.mubr.f32.mxu0 0.0
    %1116 = vmatmul.mubr.f32.gmra.mrb[0].mxu0 %v896
    %v1117 = vpop.f32.mrb[0].mxu0
    %v1118 = vadd.f32 %v803, %v1117
    %v1119 = vpop.f32.mrb[0].mxu0
    %1120 = vmatprep.mubr.f32.mxu0 0.0
    %1121 = vmatmul.mubr.f32.gmra.mrb[0].mxu0 %v899
    %v1122 = vpop.f32.mrb[0].mxu0
    %v1123 = vadd.f32 %v803, %v1122
    %v1124 = vpop.f32.mrb[0].mxu0
    %1125 = vdwg.mxu0
    %v1126 = vmul.f32 %v968, 0.5
    %v1127 = vmul.f32 %v973, 0.5
    %v1128 = vmul.f32 %v978, 0.5
    %v1129 = vmul.f32 %v983, 0.5
    %v1130 = vmul.f32 %v988, 0.5
    %v1131 = vmul.f32 %v993, 0.5
    %v1132 = vmul.f32 %v998, 0.5
    %v1133 = vmul.f32 %v1003, 0.5
    %v1134 = vmul.f32 %v1008, 0.5
    %v1135 = vmul.f32 %v1013, 0.5
    %v1136 = vmul.f32 %v1018, 0.5
    %v1137 = vmul.f32 %v1023, 0.5
    %v1138 = vmul.f32 %v1028, 0.5
    %v1139 = vmul.f32 %v1033, 0.5
    %v1140 = vmul.f32 %v1038, 0.5
    %v1141 = vmul.f32 %v1043, 0.5
    %v1142 = vmul.f32 %v1048, 0.5
    %v1143 = vmul.f32 %v1053, 0.5
    %v1144 = vmul.f32 %v1058, 0.5
    %v1145 = vmul.f32 %v1063, 0.5
    %v1146 = vmul.f32 %v1068, 0.5
    %v1147 = vmul.f32 %v1073, 0.5
    %v1148 = vmul.f32 %v1078, 0.5
    %v1149 = vmul.f32 %v1083, 0.5
    %v1150 = vmul.f32 %v1088, 0.5
    %v1151 = vmul.f32 %v1093, 0.5
    %v1152 = vmul.f32 %v1098, 0.5
    %v1153 = vmul.f32 %v1103, 0.5
    %v1154 = vmul.f32 %v1108, 0.5
    %v1155 = vmul.f32 %v1113, 0.5
    %v1156 = vmul.f32 %v1118, 0.5
    %v1157 = vmul.f32 %v1123, 0.5
    %v1158 = vmul.f32 %v1126, 1.442695
    %v1159 = vpow.pop %v1158
    %v1160 = vmul.f32 %v1127, 1.442695
    %v1161 = vpow.pop %v1160
    %v1162 = vmul.f32 %v1128, 1.442695
    %v1163 = vpow.pop %v1162
    %v1164 = vmul.f32 %v1129, 1.442695
    %v1165 = vpow.pop %v1164
    %v1166 = vmul.f32 %v1130, 1.442695
    %v1167 = vpow.pop %v1166
    %v1168 = vmul.f32 %v1131, 1.442695
    %v1169 = vpow.pop %v1168
    %v1170 = vmul.f32 %v1132, 1.442695
    %v1171 = vpow.pop %v1170
    %v1172 = vmul.f32 %v1133, 1.442695
    %v1173 = vpow.pop %v1172
    %v1174 = vmul.f32 %v1134, 1.442695
    %v1175 = vpow.pop %v1174
    %v1176 = vmul.f32 %v1135, 1.442695
    %v1177 = vpow.pop %v1176
    %v1178 = vmul.f32 %v1136, 1.442695
    %v1179 = vpow.pop %v1178
    %v1180 = vmul.f32 %v1137, 1.442695
    %v1181 = vpow.pop %v1180
    %v1182 = vmul.f32 %v1138, 1.442695
    %v1183 = vpow.pop %v1182
    %v1184 = vmul.f32 %v1139, 1.442695
    %v1185 = vpow.pop %v1184
    %v1186 = vmul.f32 %v1140, 1.442695
    %v1187 = vpow.pop %v1186
    %v1188 = vmul.f32 %v1141, 1.442695
    %v1189 = vpow.pop %v1188
    %v1190 = vmul.f32 %v1142, 1.442695
    %v1191 = vpow.pop %v1190
    %v1192 = vmul.f32 %v1143, 1.442695
    %v1193 = vpow.pop %v1192
    %v1194 = vmul.f32 %v1144, 1.442695
    %v1195 = vpow.pop %v1194
    %v1196 = vmul.f32 %v1145, 1.442695
    %v1197 = vpow.pop %v1196
    %v1198 = vmul.f32 %v1146, 1.442695
    %v1199 = vpow.pop %v1198
    %v1200 = vmul.f32 %v1147, 1.442695
    %v1201 = vpow.pop %v1200
    %v1202 = vmul.f32 %v1148, 1.442695
    %v1203 = vpow.pop %v1202
    %v1204 = vmul.f32 %v1149, 1.442695
    %v1205 = vpow.pop %v1204
    %v1206 = vmul.f32 %v1150, 1.442695
    %v1207 = vpow.pop %v1206
    %v1208 = vmul.f32 %v1151, 1.442695
    %v1209 = vpow.pop %v1208
    %v1210 = vmul.f32 %v1152, 1.442695
    %v1211 = vpow.pop %v1210
    %v1212 = vmul.f32 %v1153, 1.442695
    %v1213 = vpow.pop %v1212
    %v1214 = vmul.f32 %v1154, 1.442695
    %v1215 = vpow.pop %v1214
    %v1216 = vmul.f32 %v1155, 1.442695
    %v1217 = vpow.pop %v1216
    %v1218 = vmul.f32 %v1156, 1.442695
    %v1219 = vpow.pop %v1218
    %v1220 = vmul.f32 %v1157, 1.442695
    %v1221 = vpow.pop %v1220
    %1223 = vset.pattern.permute.xlu0 8
    %1224 = vperm.xlu0 %1223, %v1159
    %v1225 = vpop.permute.xlu0 %1224
    %1228 = vset.pattern.permute.xlu0 8
    %1229 = vperm.xlu0 %1228, %v1161
    %v1230 = vpop.permute.xlu0 %1229
    %1233 = vset.pattern.permute.xlu0 8
    %1234 = vperm.xlu0 %1233, %v1163
    %v1235 = vpop.permute.xlu0 %1234
    %1238 = vset.pattern.permute.xlu0 8
    %1239 = vperm.xlu0 %1238, %v1165
    %v1240 = vpop.permute.xlu0 %1239
    %1243 = vset.pattern.permute.xlu0 8
    %1244 = vperm.xlu0 %1243, %v1167
    %v1245 = vpop.permute.xlu0 %1244
    %1248 = vset.pattern.permute.xlu0 8
    %1249 = vperm.xlu0 %1248, %v1169
    %v1250 = vpop.permute.xlu0 %1249
    %1253 = vset.pattern.permute.xlu0 8
    %1254 = vperm.xlu0 %1253, %v1171
    %v1255 = vpop.permute.xlu0 %1254
    %1258 = vset.pattern.permute.xlu0 8
    %1259 = vperm.xlu0 %1258, %v1173
    %v1260 = vpop.permute.xlu0 %1259
    %1263 = vset.pattern.permute.xlu0 8
    %1264 = vperm.xlu0 %1263, %v1175
    %v1265 = vpop.permute.xlu0 %1264
    %1268 = vset.pattern.permute.xlu0 8
    %1269 = vperm.xlu0 %1268, %v1177
    %v1270 = vpop.permute.xlu0 %1269
    %1273 = vset.pattern.permute.xlu0 8
    %1274 = vperm.xlu0 %1273, %v1179
    %v1275 = vpop.permute.xlu0 %1274
    %1278 = vset.pattern.permute.xlu0 8
    %1279 = vperm.xlu0 %1278, %v1181
    %v1280 = vpop.permute.xlu0 %1279
    %1283 = vset.pattern.permute.xlu0 8
    %1284 = vperm.xlu0 %1283, %v1183
    %v1285 = vpop.permute.xlu0 %1284
    %1288 = vset.pattern.permute.xlu0 8
    %1289 = vperm.xlu0 %1288, %v1185
    %v1290 = vpop.permute.xlu0 %1289
    %1293 = vset.pattern.permute.xlu0 8
    %1294 = vperm.xlu0 %1293, %v1187
    %v1295 = vpop.permute.xlu0 %1294
    %1298 = vset.pattern.permute.xlu0 8
    %1299 = vperm.xlu0 %1298, %v1189
    %v1300 = vpop.permute.xlu0 %1299
    %1303 = vset.pattern.permute.xlu0 8
    %1304 = vperm.xlu0 %1303, %v1191
    %v1305 = vpop.permute.xlu0 %1304
    %1308 = vset.pattern.permute.xlu0 8
    %1309 = vperm.xlu0 %1308, %v1193
    %v1310 = vpop.permute.xlu0 %1309
    %1313 = vset.pattern.permute.xlu0 8
    %1314 = vperm.xlu0 %1313, %v1195
    %v1315 = vpop.permute.xlu0 %1314
    %1318 = vset.pattern.permute.xlu0 8
    %1319 = vperm.xlu0 %1318, %v1197
    %v1320 = vpop.permute.xlu0 %1319
    %1323 = vset.pattern.permute.xlu0 8
    %1324 = vperm.xlu0 %1323, %v1199
    %v1325 = vpop.permute.xlu0 %1324
    %1328 = vset.pattern.permute.xlu0 8
    %1329 = vperm.xlu0 %1328, %v1201
    %v1330 = vpop.permute.xlu0 %1329
    %1333 = vset.pattern.permute.xlu0 8
    %1334 = vperm.xlu0 %1333, %v1203
    %v1335 = vpop.permute.xlu0 %1334
    %1338 = vset.pattern.permute.xlu0 8
    %1339 = vperm.xlu0 %1338, %v1205
    %v1340 = vpop.permute.xlu0 %1339
    %1343 = vset.pattern.permute.xlu0 8
    %1344 = vperm.xlu0 %1343, %v1207
    %v1345 = vpop.permute.xlu0 %1344
    %1348 = vset.pattern.permute.xlu0 8
    %1349 = vperm.xlu0 %1348, %v1209
    %v1350 = vpop.permute.xlu0 %1349
    %1353 = vset.pattern.permute.xlu0 8
    %1354 = vperm.xlu0 %1353, %v1211
    %v1355 = vpop.permute.xlu0 %1354
    %1358 = vset.pattern.permute.xlu0 8
    %1359 = vperm.xlu0 %1358, %v1213
    %v1360 = vpop.permute.xlu0 %1359
    %1363 = vset.pattern.permute.xlu0 8
    %1364 = vperm.xlu0 %1363, %v1215
    %v1365 = vpop.permute.xlu0 %1364
    %1368 = vset.pattern.permute.xlu0 8
    %1369 = vperm.xlu0 %1368, %v1217
    %v1370 = vpop.permute.xlu0 %1369
    %1373 = vset.pattern.permute.xlu0 8
    %1374 = vperm.xlu0 %1373, %v1219
    %v1375 = vpop.permute.xlu0 %1374
    %1378 = vset.pattern.permute.xlu0 8
    %1379 = vperm.xlu0 %1378, %v1221
    %v1380 = vpop.permute.xlu0 %1379
    %v1382 = vmul.f32 %v1225, %v36
    %v1383 = vmul.f32 %v1230, %v37
    %v1384 = vmul.f32 %v1235, %v38
    %v1385 = vmul.f32 %v1240, %v39
    %v1386 = vmul.f32 %v1245, %v40
    %v1387 = vmul.f32 %v1250, %v41
    %v1388 = vmul.f32 %v1255, %v42
    %v1389 = vmul.f32 %v1260, %v43
    %v1390 = vmul.f32 %v1265, %v44
    %v1391 = vmul.f32 %v1270, %v45
    %v1392 = vmul.f32 %v1275, %v46
    %v1393 = vmul.f32 %v1280, %v47
    %v1394 = vmul.f32 %v1285, %v48
    %v1395 = vmul.f32 %v1290, %v49
    %v1396 = vmul.f32 %v1295, %v50
    %v1397 = vmul.f32 %v1300, %v51
    %v1398 = vmul.f32 %v1305, %v52
    %v1399 = vmul.f32 %v1310, %v53
    %v1400 = vmul.f32 %v1315, %v54
    %v1401 = vmul.f32 %v1320, %v55
    %v1402 = vmul.f32 %v1325, %v56
    %v1403 = vmul.f32 %v1330, %v57
    %v1404 = vmul.f32 %v1335, %v58
    %v1405 = vmul.f32 %v1340, %v59
    %v1406 = vmul.f32 %v1345, %v60
    %v1407 = vmul.f32 %v1350, %v61
    %v1408 = vmul.f32 %v1355, %v62
    %v1409 = vmul.f32 %v1360, %v63
    %v1410 = vmul.f32 %v1365, %v64
    %v1411 = vmul.f32 %v1370, %v65
    %v1412 = vmul.f32 %v1375, %v66
    %v1413 = vmul.f32 %v1380, %v67
    %1446 = vrot.lane.b32.xlu0 %v1382, 96
    %v1447 = vpop.permute.xlu0 %1446
    %1448 = vrot.lane.b32.xlu0 %v1383, 96
    %v1449 = vpop.permute.xlu0 %1448
    %1450 = vrot.lane.b32.xlu0 %v1384, 96
    %v1451 = vpop.permute.xlu0 %1450
    %1452 = vrot.lane.b32.xlu0 %v1385, 96
    %v1453 = vpop.permute.xlu0 %1452
    %1454 = vrot.lane.b32.xlu0 %v1386, 96
    %v1455 = vpop.permute.xlu0 %1454
    %1456 = vrot.lane.b32.xlu0 %v1387, 96
    %v1457 = vpop.permute.xlu0 %1456
    %1458 = vrot.lane.b32.xlu0 %v1388, 96
    %v1459 = vpop.permute.xlu0 %1458
    %1460 = vrot.lane.b32.xlu0 %v1389, 96
    %v1461 = vpop.permute.xlu0 %1460
    %1462 = vrot.lane.b32.xlu0 %v1390, 96
    %v1463 = vpop.permute.xlu0 %1462
    %1464 = vrot.lane.b32.xlu0 %v1391, 96
    %v1465 = vpop.permute.xlu0 %1464
    %1466 = vrot.lane.b32.xlu0 %v1392, 96
    %v1467 = vpop.permute.xlu0 %1466
    %1468 = vrot.lane.b32.xlu0 %v1393, 96
    %v1469 = vpop.permute.xlu0 %1468
    %1470 = vrot.lane.b32.xlu0 %v1394, 96
    %v1471 = vpop.permute.xlu0 %1470
    %1472 = vrot.lane.b32.xlu0 %v1395, 96
    %v1473 = vpop.permute.xlu0 %1472
    %1474 = vrot.lane.b32.xlu0 %v1396, 96
    %v1475 = vpop.permute.xlu0 %1474
    %1476 = vrot.lane.b32.xlu0 %v1397, 96
    %v1477 = vpop.permute.xlu0 %1476
    %1478 = vrot.lane.b32.xlu0 %v1398, 96
    %v1479 = vpop.permute.xlu0 %1478
    %1480 = vrot.lane.b32.xlu0 %v1399, 96
    %v1481 = vpop.permute.xlu0 %1480
    %1482 = vrot.lane.b32.xlu0 %v1400, 96
    %v1483 = vpop.permute.xlu0 %1482
    %1484 = vrot.lane.b32.xlu0 %v1401, 96
    %v1485 = vpop.permute.xlu0 %1484
    %1486 = vrot.lane.b32.xlu0 %v1402, 96
    %v1487 = vpop.permute.xlu0 %1486
    %1488 = vrot.lane.b32.xlu0 %v1403, 96
    %v1489 = vpop.permute.xlu0 %1488
    %1490 = vrot.lane.b32.xlu0 %v1404, 96
    %v1491 = vpop.permute.xlu0 %1490
    %1492 = vrot.lane.b32.xlu0 %v1405, 96
    %v1493 = vpop.permute.xlu0 %1492
    %1494 = vrot.lane.b32.xlu0 %v1406, 96
    %v1495 = vpop.permute.xlu0 %1494
    %1496 = vrot.lane.b32.xlu0 %v1407, 96
    %v1497 = vpop.permute.xlu0 %1496
    %1498 = vrot.lane.b32.xlu0 %v1408, 96
    %v1499 = vpop.permute.xlu0 %1498
    %1500 = vrot.lane.b32.xlu0 %v1409, 96
    %v1501 = vpop.permute.xlu0 %1500
    %1502 = vrot.lane.b32.xlu0 %v1410, 96
    %v1503 = vpop.permute.xlu0 %1502
    %1504 = vrot.lane.b32.xlu0 %v1411, 96
    %v1505 = vpop.permute.xlu0 %1504
    %1506 = vrot.lane.b32.xlu0 %v1412, 96
    %v1507 = vpop.permute.xlu0 %1506
    %1508 = vrot.lane.b32.xlu0 %v1413, 96
    %v1509 = vpop.permute.xlu0 %1508
    %v1542 = vadd.f32 %v968, %v1447
    %v1543 = vadd.f32 %v973, %v1449
    %v1544 = vadd.f32 %v978, %v1451
    %v1545 = vadd.f32 %v983, %v1453
    %v1546 = vadd.f32 %v988, %v1455
    %v1547 = vadd.f32 %v993, %v1457
    %v1548 = vadd.f32 %v998, %v1459
    %v1549 = vadd.f32 %v1003, %v1461
    %v1550 = vadd.f32 %v1008, %v1463
    %v1551 = vadd.f32 %v1013, %v1465
    %v1552 = vadd.f32 %v1018, %v1467
    %v1553 = vadd.f32 %v1023, %v1469
    %v1554 = vadd.f32 %v1028, %v1471
    %v1555 = vadd.f32 %v1033, %v1473
    %v1556 = vadd.f32 %v1038, %v1475
    %v1557 = vadd.f32 %v1043, %v1477
    %v1558 = vadd.f32 %v1048, %v1479
    %v1559 = vadd.f32 %v1053, %v1481
    %v1560 = vadd.f32 %v1058, %v1483
    %v1561 = vadd.f32 %v1063, %v1485
    %v1562 = vadd.f32 %v1068, %v1487
    %v1563 = vadd.f32 %v1073, %v1489
    %v1564 = vadd.f32 %v1078, %v1491
    %v1565 = vadd.f32 %v1083, %v1493
    %v1566 = vadd.f32 %v1088, %v1495
    %v1567 = vadd.f32 %v1093, %v1497
    %v1568 = vadd.f32 %v1098, %v1499
    %v1569 = vadd.f32 %v1103, %v1501
    %v1570 = vadd.f32 %v1108, %v1503
    %v1571 = vadd.f32 %v1113, %v1505
    %v1572 = vadd.f32 %v1118, %v1507
    %v1573 = vadd.f32 %v1123, %v1509
    %v1574 = vld [vmem:[%s4] sm:$0xff]
    %v1576 = vlaneseq
    %v1577 = vshrl.u32 %v1576, 7
    %v1578 = vsub.s32 0, %v1577
    %v1579 = vrot.slane %v33, %v1578
    %vm1581 = vcmask 64512
    %v1583 = vsel %vm1581, %v1542, 0
    %v1586 = vsel %vm1581, %v1543, 0
    %v1589 = vsel %vm1581, %v1544, 0
    %v1592 = vsel %vm1581, %v1545, 0
    %v1595 = vsel %vm1581, %v1546, 0
    %v1598 = vsel %vm1581, %v1547, 0
    %v1601 = vsel %vm1581, %v1548, 0
    %v1604 = vsel %vm1581, %v1549, 0
    %v1607 = vsel %vm1581, %v1550, 0
    %v1610 = vsel %vm1581, %v1551, 0
    %v1613 = vsel %vm1581, %v1552, 0
    %v1616 = vsel %vm1581, %v1553, 0
    %v1619 = vsel %vm1581, %v1554, 0
    %v1622 = vsel %vm1581, %v1555, 0
    %v1625 = vsel %vm1581, %v1556, 0
    %v1628 = vsel %vm1581, %v1557, 0
    %v1631 = vsel %vm1581, %v1558, 0
    %v1634 = vsel %vm1581, %v1559, 0
    %v1637 = vsel %vm1581, %v1560, 0
    %v1640 = vsel %vm1581, %v1561, 0
    %v1643 = vsel %vm1581, %v1562, 0
    %v1646 = vsel %vm1581, %v1563, 0
    %v1649 = vsel %vm1581, %v1564, 0
    %v1652 = vsel %vm1581, %v1565, 0
    %v1655 = vsel %vm1581, %v1566, 0
    %v1658 = vsel %vm1581, %v1567, 0
    %v1661 = vsel %vm1581, %v1568, 0
    %v1664 = vsel %vm1581, %v1569, 0
    %v1667 = vsel %vm1581, %v1570, 0
    %v1670 = vsel %vm1581, %v1571, 0
    %v1673 = vsel %vm1581, %v1572, 0
    %v1676 = vsel %vm1581, %v1573, 0
    %1678 = vmatprep.subr.mxu0 0.0
    %1679 = vmatpush1.msra.mxu0 %v1574
    %1680 = vmatprep.subr.mxu0 0.0
    %1681 = vmatpush1.msra.mxu0 0.0
    %1682 = vmatprep.subr.mxu0 0.0
    %1683 = vmatpush1.msra.mxu0 0.0
    %1684 = vmatprep.subr.mxu0 0.0
    %1685 = vmatpush1.msra.mxu0 0.0
    %1686 = vmatprep.subr.mxu0 0.0
    %1687 = vmatpush1.msra.mxu0 0.0
    %1688 = vmatprep.subr.mxu0 0.0
    %1689 = vmatpush1.msra.mxu0 0.0
    %1690 = vmatprep.subr.mxu0 0.0
    %1691 = vmatpush1.msra.mxu0 0.0
    %1692 = vmatprep.subr.mxu0 0.0
    %1693 = vmatpush1.msra.mxu0 0.0
    %1694 = vmatprep.subr.mxu0 0.0
    %1695 = vmatpush1.msra.mxu0 0.0
    %1696 = vmatprep.subr.mxu0 0.0
    %1697 = vmatpush1.msra.mxu0 0.0
    %1698 = vmatprep.subr.mxu0 0.0
    %1699 = vmatpush1.msra.mxu0 0.0
    %1700 = vmatprep.subr.mxu0 0.0
    %1701 = vmatpush1.msra.mxu0 0.0
    %1702 = vmatprep.subr.mxu0 0.0
    %1703 = vmatpush1.msra.mxu0 0.0
    %1704 = vmatprep.subr.mxu0 0.0
    %1705 = vmatpush1.msra.mxu0 0.0
    %1706 = vmatprep.subr.mxu0 0.0
    %1707 = vmatpush1.msra.mxu0 0.0
    %1708 = vmatprep.subr.mxu0 0.0
    %1709 = vmatpush1.msra.mxu0 0.0
    %1710 = vmatprep.subr.mxu0 0.0
    %1711 = vmatpush1.msra.mxu0 0.0
    %1712 = vmatprep.subr.mxu0 0.0
    %1713 = vmatpush1.msra.mxu0 0.0
    %1714 = vmatprep.subr.mxu0 0.0
    %1715 = vmatpush1.msra.mxu0 0.0
    %1716 = vmatprep.subr.mxu0 0.0
    %1717 = vmatpush1.msra.mxu0 0.0
    %1718 = vmatprep.subr.mxu0 0.0
    %1719 = vmatpush1.msra.mxu0 0.0
    %1720 = vmatprep.subr.mxu0 0.0
    %1721 = vmatpush1.msra.mxu0 0.0
    %1722 = vmatprep.subr.mxu0 0.0
    %1723 = vmatpush1.msra.mxu0 0.0
    %1724 = vmatprep.subr.mxu0 0.0
    %1725 = vmatpush1.msra.mxu0 0.0
    %1726 = vmatprep.subr.mxu0 0.0
    %1727 = vmatpush1.msra.mxu0 0.0
    %1728 = vmatprep.subr.mxu0 0.0
    %1729 = vmatpush1.msra.mxu0 0.0
    %1730 = vmatprep.subr.mxu0 0.0
    %1731 = vmatpush1.msra.mxu0 0.0
    %1732 = vmatprep.subr.mxu0 0.0
    %1733 = vmatpush1.msra.mxu0 0.0
    %1734 = vmatprep.subr.mxu0 0.0
    %1735 = vmatpush1.msra.mxu0 0.0
    %1736 = vmatprep.subr.mxu0 0.0
    %1737 = vmatpush1.msra.mxu0 0.0
    %1738 = vmatprep.subr.mxu0 0.0
    %1739 = vmatpush1.msra.mxu0 0.0
    %1740 = vmatprep.subr.mxu0 0.0
    %1741 = vmatpush1.msra.mxu0 0.0
    %1742 = vmatprep.mubr.f32.mxu0 0.0
    %1743 = vmatmul.mubr.f32.gmra.mrb[0].mxu0 %v1583
    %v1744 = vpop.f32.mrb[0].mxu0
    %v1745 = vadd.f32 %v1579, %v1744
    %v1746 = vpop.f32.mrb[0].mxu0
    %1747 = vmatprep.mubr.f32.mxu0 0.0
    %1748 = vmatmul.mubr.f32.gmra.mrb[0].mxu0 %v1586
    %v1749 = vpop.f32.mrb[0].mxu0
    %v1750 = vadd.f32 %v1579, %v1749
    %v1751 = vpop.f32.mrb[0].mxu0
    %1752 = vmatprep.mubr.f32.mxu0 0.0
    %1753 = vmatmul.mubr.f32.gmra.mrb[0].mxu0 %v1589
    %v1754 = vpop.f32.mrb[0].mxu0
    %v1755 = vadd.f32 %v1579, %v1754
    %v1756 = vpop.f32.mrb[0].mxu0
    %1757 = vmatprep.mubr.f32.mxu0 0.0
    %1758 = vmatmul.mubr.f32.gmra.mrb[0].mxu0 %v1592
    %v1759 = vpop.f32.mrb[0].mxu0
    %v1760 = vadd.f32 %v1579, %v1759
    %v1761 = vpop.f32.mrb[0].mxu0
    %1762 = vmatprep.mubr.f32.mxu0 0.0
    %1763 = vmatmul.mubr.f32.gmra.mrb[0].mxu0 %v1595
    %v1764 = vpop.f32.mrb[0].mxu0
    %v1765 = vadd.f32 %v1579, %v1764
    %v1766 = vpop.f32.mrb[0].mxu0
    %1767 = vmatprep.mubr.f32.mxu0 0.0
    %1768 = vmatmul.mubr.f32.gmra.mrb[0].mxu0 %v1598
    %v1769 = vpop.f32.mrb[0].mxu0
    %v1770 = vadd.f32 %v1579, %v1769
    %v1771 = vpop.f32.mrb[0].mxu0
    %1772 = vmatprep.mubr.f32.mxu0 0.0
    %1773 = vmatmul.mubr.f32.gmra.mrb[0].mxu0 %v1601
    %v1774 = vpop.f32.mrb[0].mxu0
    %v1775 = vadd.f32 %v1579, %v1774
    %v1776 = vpop.f32.mrb[0].mxu0
    %1777 = vmatprep.mubr.f32.mxu0 0.0
    %1778 = vmatmul.mubr.f32.gmra.mrb[0].mxu0 %v1604
    %v1779 = vpop.f32.mrb[0].mxu0
    %v1780 = vadd.f32 %v1579, %v1779
    %v1781 = vpop.f32.mrb[0].mxu0
    %1782 = vmatprep.mubr.f32.mxu0 0.0
    %1783 = vmatmul.mubr.f32.gmra.mrb[0].mxu0 %v1607
    %v1784 = vpop.f32.mrb[0].mxu0
    %v1785 = vadd.f32 %v1579, %v1784
    %v1786 = vpop.f32.mrb[0].mxu0
    %1787 = vmatprep.mubr.f32.mxu0 0.0
    %1788 = vmatmul.mubr.f32.gmra.mrb[0].mxu0 %v1610
    %v1789 = vpop.f32.mrb[0].mxu0
    %v1790 = vadd.f32 %v1579, %v1789
    %v1791 = vpop.f32.mrb[0].mxu0
    %1792 = vmatprep.mubr.f32.mxu0 0.0
    %1793 = vmatmul.mubr.f32.gmra.mrb[0].mxu0 %v1613
    %v1794 = vpop.f32.mrb[0].mxu0
    %v1795 = vadd.f32 %v1579, %v1794
    %v1796 = vpop.f32.mrb[0].mxu0
    %1797 = vmatprep.mubr.f32.mxu0 0.0
    %1798 = vmatmul.mubr.f32.gmra.mrb[0].mxu0 %v1616
    %v1799 = vpop.f32.mrb[0].mxu0
    %v1800 = vadd.f32 %v1579, %v1799
    %v1801 = vpop.f32.mrb[0].mxu0
    %1802 = vmatprep.mubr.f32.mxu0 0.0
    %1803 = vmatmul.mubr.f32.gmra.mrb[0].mxu0 %v1619
    %v1804 = vpop.f32.mrb[0].mxu0
    %v1805 = vadd.f32 %v1579, %v1804
    %v1806 = vpop.f32.mrb[0].mxu0
    %1807 = vmatprep.mubr.f32.mxu0 0.0
    %1808 = vmatmul.mubr.f32.gmra.mrb[0].mxu0 %v1622
    %v1809 = vpop.f32.mrb[0].mxu0
    %v1810 = vadd.f32 %v1579, %v1809
    %v1811 = vpop.f32.mrb[0].mxu0
    %1812 = vmatprep.mubr.f32.mxu0 0.0
    %1813 = vmatmul.mubr.f32.gmra.mrb[0].mxu0 %v1625
    %v1814 = vpop.f32.mrb[0].mxu0
    %v1815 = vadd.f32 %v1579, %v1814
    %v1816 = vpop.f32.mrb[0].mxu0
    %1817 = vmatprep.mubr.f32.mxu0 0.0
    %1818 = vmatmul.mubr.f32.gmra.mrb[0].mxu0 %v1628
    %v1819 = vpop.f32.mrb[0].mxu0
    %v1820 = vadd.f32 %v1579, %v1819
    %v1821 = vpop.f32.mrb[0].mxu0
    %1822 = vmatprep.mubr.f32.mxu0 0.0
    %1823 = vmatmul.mubr.f32.gmra.mrb[0].mxu0 %v1631
    %v1824 = vpop.f32.mrb[0].mxu0
    %v1825 = vadd.f32 %v1579, %v1824
    %v1826 = vpop.f32.mrb[0].mxu0
    %1827 = vmatprep.mubr.f32.mxu0 0.0
    %1828 = vmatmul.mubr.f32.gmra.mrb[0].mxu0 %v1634
    %v1829 = vpop.f32.mrb[0].mxu0
    %v1830 = vadd.f32 %v1579, %v1829
    %v1831 = vpop.f32.mrb[0].mxu0
    %1832 = vmatprep.mubr.f32.mxu0 0.0
    %1833 = vmatmul.mubr.f32.gmra.mrb[0].mxu0 %v1637
    %v1834 = vpop.f32.mrb[0].mxu0
    %v1835 = vadd.f32 %v1579, %v1834
    %v1836 = vpop.f32.mrb[0].mxu0
    %1837 = vmatprep.mubr.f32.mxu0 0.0
    %1838 = vmatmul.mubr.f32.gmra.mrb[0].mxu0 %v1640
    %v1839 = vpop.f32.mrb[0].mxu0
    %v1840 = vadd.f32 %v1579, %v1839
    %v1841 = vpop.f32.mrb[0].mxu0
    %1842 = vmatprep.mubr.f32.mxu0 0.0
    %1843 = vmatmul.mubr.f32.gmra.mrb[0].mxu0 %v1643
    %v1844 = vpop.f32.mrb[0].mxu0
    %v1845 = vadd.f32 %v1579, %v1844
    %v1846 = vpop.f32.mrb[0].mxu0
    %1847 = vmatprep.mubr.f32.mxu0 0.0
    %1848 = vmatmul.mubr.f32.gmra.mrb[0].mxu0 %v1646
    %v1849 = vpop.f32.mrb[0].mxu0
    %v1850 = vadd.f32 %v1579, %v1849
    %v1851 = vpop.f32.mrb[0].mxu0
    %1852 = vmatprep.mubr.f32.mxu0 0.0
    %1853 = vmatmul.mubr.f32.gmra.mrb[0].mxu0 %v1649
    %v1854 = vpop.f32.mrb[0].mxu0
    %v1855 = vadd.f32 %v1579, %v1854
    %v1856 = vpop.f32.mrb[0].mxu0
    %1857 = vmatprep.mubr.f32.mxu0 0.0
    %1858 = vmatmul.mubr.f32.gmra.mrb[0].mxu0 %v1652
    %v1859 = vpop.f32.mrb[0].mxu0
    %v1860 = vadd.f32 %v1579, %v1859
    %v1861 = vpop.f32.mrb[0].mxu0
    %1862 = vmatprep.mubr.f32.mxu0 0.0
    %1863 = vmatmul.mubr.f32.gmra.mrb[0].mxu0 %v1655
    %v1864 = vpop.f32.mrb[0].mxu0
    %v1865 = vadd.f32 %v1579, %v1864
    %v1866 = vpop.f32.mrb[0].mxu0
    %1867 = vmatprep.mubr.f32.mxu0 0.0
    %1868 = vmatmul.mubr.f32.gmra.mrb[0].mxu0 %v1658
    %v1869 = vpop.f32.mrb[0].mxu0
    %v1870 = vadd.f32 %v1579, %v1869
    %v1871 = vpop.f32.mrb[0].mxu0
    %1872 = vmatprep.mubr.f32.mxu0 0.0
    %1873 = vmatmul.mubr.f32.gmra.mrb[0].mxu0 %v1661
    %v1874 = vpop.f32.mrb[0].mxu0
    %v1875 = vadd.f32 %v1579, %v1874
    %v1876 = vpop.f32.mrb[0].mxu0
    %1877 = vmatprep.mubr.f32.mxu0 0.0
    %1878 = vmatmul.mubr.f32.gmra.mrb[0].mxu0 %v1664
    %v1879 = vpop.f32.mrb[0].mxu0
    %v1880 = vadd.f32 %v1579, %v1879
    %v1881 = vpop.f32.mrb[0].mxu0
    %1882 = vmatprep.mubr.f32.mxu0 0.0
    %1883 = vmatmul.mubr.f32.gmra.mrb[0].mxu0 %v1667
    %v1884 = vpop.f32.mrb[0].mxu0
    %v1885 = vadd.f32 %v1579, %v1884
    %v1886 = vpop.f32.mrb[0].mxu0
    %1887 = vmatprep.mubr.f32.mxu0 0.0
    %1888 = vmatmul.mubr.f32.gmra.mrb[0].mxu0 %v1670
    %v1889 = vpop.f32.mrb[0].mxu0
    %v1890 = vadd.f32 %v1579, %v1889
    %v1891 = vpop.f32.mrb[0].mxu0
    %1892 = vmatprep.mubr.f32.mxu0 0.0
    %1893 = vmatmul.mubr.f32.gmra.mrb[0].mxu0 %v1673
    %v1894 = vpop.f32.mrb[0].mxu0
    %v1895 = vadd.f32 %v1579, %v1894
    %v1896 = vpop.f32.mrb[0].mxu0
    %1897 = vmatprep.mubr.f32.mxu0 0.0
    %1898 = vmatmul.mubr.f32.gmra.mrb[0].mxu0 %v1676
    %v1899 = vpop.f32.mrb[0].mxu0
    %v1900 = vadd.f32 %v1579, %v1899
    %v1901 = vpop.f32.mrb[0].mxu0
    %1902 = vdwg.mxu0
    %v1903 = vtanh.pop %v1745
    %v1904 = vtanh.pop %v1750
    %v1905 = vtanh.pop %v1755
    %v1906 = vtanh.pop %v1760
    %v1907 = vtanh.pop %v1765
    %v1908 = vtanh.pop %v1770
    %v1909 = vtanh.pop %v1775
    %v1910 = vtanh.pop %v1780
    %v1911 = vtanh.pop %v1785
    %v1912 = vtanh.pop %v1790
    %v1913 = vtanh.pop %v1795
    %v1914 = vtanh.pop %v1800
    %v1915 = vtanh.pop %v1805
    %v1916 = vtanh.pop %v1810
    %v1917 = vtanh.pop %v1815
    %v1918 = vtanh.pop %v1820
    %v1919 = vtanh.pop %v1825
    %v1920 = vtanh.pop %v1830
    %v1921 = vtanh.pop %v1835
    %v1922 = vtanh.pop %v1840
    %v1923 = vtanh.pop %v1845
    %v1924 = vtanh.pop %v1850
    %v1925 = vtanh.pop %v1855
    %v1926 = vtanh.pop %v1860
    %v1927 = vtanh.pop %v1865
    %v1928 = vtanh.pop %v1870
    %v1929 = vtanh.pop %v1875
    %v1930 = vtanh.pop %v1880
    %v1931 = vtanh.pop %v1885
    %v1932 = vtanh.pop %v1890
    %v1933 = vtanh.pop %v1895
    %v1934 = vtanh.pop %v1900
    %v1935 = vld [vmem:[%s5] sm:$0xff]
    %v1936 = vld [vmem:[%s5 + $0x8] sm:$0xff]
    %v1937 = vld [vmem:[%s5 + $0x10] sm:$0xff]
    %v1938 = vld [vmem:[%s5 + $0x18] sm:$0xff]
    %v1940 = vlaneseq
    %v1941 = vshrl.u32 %v1940, 7
    %v1942 = vsub.s32 0, %v1941
    %v1943 = vrot.slane %v34, %v1942
    %v1946 = vsel %vm78, %v1903, 0
    %v1949 = vsel %vm78, %v1904, 0
    %v1952 = vsel %vm78, %v1905, 0
    %v1955 = vsel %vm78, %v1906, 0
    %v1958 = vsel %vm78, %v1907, 0
    %v1961 = vsel %vm78, %v1908, 0
    %v1964 = vsel %vm78, %v1909, 0
    %v1967 = vsel %vm78, %v1910, 0
    %v1970 = vsel %vm78, %v1911, 0
    %v1973 = vsel %vm78, %v1912, 0
    %v1976 = vsel %vm78, %v1913, 0
    %v1979 = vsel %vm78, %v1914, 0
    %v1982 = vsel %vm78, %v1915, 0
    %v1985 = vsel %vm78, %v1916, 0
    %v1988 = vsel %vm78, %v1917, 0
    %v1991 = vsel %vm78, %v1918, 0
    %v1994 = vsel %vm78, %v1919, 0
    %v1997 = vsel %vm78, %v1920, 0
    %v2000 = vsel %vm78, %v1921, 0
    %v2003 = vsel %vm78, %v1922, 0
    %v2006 = vsel %vm78, %v1923, 0
    %v2009 = vsel %vm78, %v1924, 0
    %v2012 = vsel %vm78, %v1925, 0
    %v2015 = vsel %vm78, %v1926, 0
    %v2018 = vsel %vm78, %v1927, 0
    %v2021 = vsel %vm78, %v1928, 0
    %v2024 = vsel %vm78, %v1929, 0
    %v2027 = vsel %vm78, %v1930, 0
    %v2030 = vsel %vm78, %v1931, 0
    %v2033 = vsel %vm78, %v1932, 0
    %v2036 = vsel %vm78, %v1933, 0
    %v2039 = vsel %vm78, %v1934, 0
    %2041 = vmatprep.subr.mxu0 0.0
    %2042 = vmatpush1.msra.mxu0 %v1935
    %2043 = vmatprep.subr.mxu0 0.0
    %2044 = vmatpush1.msra.mxu0 %v1936
    %2045 = vmatprep.subr.mxu0 0.0
    %2046 = vmatpush1.msra.mxu0 %v1937
    %2047 = vmatprep.subr.mxu0 0.0
    %2048 = vmatpush1.msra.mxu0 %v1938
    %2049 = vmatprep.subr.mxu0 0.0
    %2050 = vmatpush1.msra.mxu0 0.0
    %2051 = vmatprep.subr.mxu0 0.0
    %2052 = vmatpush1.msra.mxu0 0.0
    %2053 = vmatprep.subr.mxu0 0.0
    %2054 = vmatpush1.msra.mxu0 0.0
    %2055 = vmatprep.subr.mxu0 0.0
    %2056 = vmatpush1.msra.mxu0 0.0
    %2057 = vmatprep.subr.mxu0 0.0
    %2058 = vmatpush1.msra.mxu0 0.0
    %2059 = vmatprep.subr.mxu0 0.0
    %2060 = vmatpush1.msra.mxu0 0.0
    %2061 = vmatprep.subr.mxu0 0.0
    %2062 = vmatpush1.msra.mxu0 0.0
    %2063 = vmatprep.subr.mxu0 0.0
    %2064 = vmatpush1.msra.mxu0 0.0
    %2065 = vmatprep.subr.mxu0 0.0
    %2066 = vmatpush1.msra.mxu0 0.0
    %2067 = vmatprep.subr.mxu0 0.0
    %2068 = vmatpush1.msra.mxu0 0.0
    %2069 = vmatprep.subr.mxu0 0.0
    %2070 = vmatpush1.msra.mxu0 0.0
    %2071 = vmatprep.subr.mxu0 0.0
    %2072 = vmatpush1.msra.mxu0 0.0
    %2073 = vmatprep.subr.mxu0 0.0
    %2074 = vmatpush1.msra.mxu0 0.0
    %2075 = vmatprep.subr.mxu0 0.0
    %2076 = vmatpush1.msra.mxu0 0.0
    %2077 = vmatprep.subr.mxu0 0.0
    %2078 = vmatpush1.msra.mxu0 0.0
    %2079 = vmatprep.subr.mxu0 0.0
    %2080 = vmatpush1.msra.mxu0 0.0
    %2081 = vmatprep.subr.mxu0 0.0
    %2082 = vmatpush1.msra.mxu0 0.0
    %2083 = vmatprep.subr.mxu0 0.0
    %2084 = vmatpush1.msra.mxu0 0.0
    %2085 = vmatprep.subr.mxu0 0.0
    %2086 = vmatpush1.msra.mxu0 0.0
    %2087 = vmatprep.subr.mxu0 0.0
    %2088 = vmatpush1.msra.mxu0 0.0
    %2089 = vmatprep.subr.mxu0 0.0
    %2090 = vmatpush1.msra.mxu0 0.0
    %2091 = vmatprep.subr.mxu0 0.0
    %2092 = vmatpush1.msra.mxu0 0.0
    %2093 = vmatprep.subr.mxu0 0.0
    %2094 = vmatpush1.msra.mxu0 0.0
    %2095 = vmatprep.subr.mxu0 0.0
    %2096 = vmatpush1.msra.mxu0 0.0
    %2097 = vmatprep.subr.mxu0 0.0
    %2098 = vmatpush1.msra.mxu0 0.0
    %2099 = vmatprep.subr.mxu0 0.0
    %2100 = vmatpush1.msra.mxu0 0.0
    %2101 = vmatprep.subr.mxu0 0.0
    %2102 = vmatpush1.msra.mxu0 0.0
    %2103 = vmatprep.subr.mxu0 0.0
    %2104 = vmatpush1.msra.mxu0 0.0
    %2105 = vmatprep.mubr.f32.mxu0 0.0
    %2106 = vmatmul.mubr.f32.gmra.mrb[0].mxu0 %v1946
    %v2107 = vpop.f32.mrb[0].mxu0
    %v2108 = vadd.f32 %v1943, %v2107
    %v2109 = vpop.f32.mrb[0].mxu0
    %2110 = vmatprep.mubr.f32.mxu0 0.0
    %2111 = vmatmul.mubr.f32.gmra.mrb[0].mxu0 %v1949
    %v2112 = vpop.f32.mrb[0].mxu0
    %v2113 = vadd.f32 %v1943, %v2112
    %v2114 = vpop.f32.mrb[0].mxu0
    %2115 = vmatprep.mubr.f32.mxu0 0.0
    %2116 = vmatmul.mubr.f32.gmra.mrb[0].mxu0 %v1952
    %v2117 = vpop.f32.mrb[0].mxu0
    %v2118 = vadd.f32 %v1943, %v2117
    %v2119 = vpop.f32.mrb[0].mxu0
    %2120 = vmatprep.mubr.f32.mxu0 0.0
    %2121 = vmatmul.mubr.f32.gmra.mrb[0].mxu0 %v1955
    %v2122 = vpop.f32.mrb[0].mxu0
    %v2123 = vadd.f32 %v1943, %v2122
    %v2124 = vpop.f32.mrb[0].mxu0
    %2125 = vmatprep.mubr.f32.mxu0 0.0
    %2126 = vmatmul.mubr.f32.gmra.mrb[0].mxu0 %v1958
    %v2127 = vpop.f32.mrb[0].mxu0
    %v2128 = vadd.f32 %v1943, %v2127
    %v2129 = vpop.f32.mrb[0].mxu0
    %2130 = vmatprep.mubr.f32.mxu0 0.0
    %2131 = vmatmul.mubr.f32.gmra.mrb[0].mxu0 %v1961
    %v2132 = vpop.f32.mrb[0].mxu0
    %v2133 = vadd.f32 %v1943, %v2132
    %v2134 = vpop.f32.mrb[0].mxu0
    %2135 = vmatprep.mubr.f32.mxu0 0.0
    %2136 = vmatmul.mubr.f32.gmra.mrb[0].mxu0 %v1964
    %v2137 = vpop.f32.mrb[0].mxu0
    %v2138 = vadd.f32 %v1943, %v2137
    %v2139 = vpop.f32.mrb[0].mxu0
    %2140 = vmatprep.mubr.f32.mxu0 0.0
    %2141 = vmatmul.mubr.f32.gmra.mrb[0].mxu0 %v1967
    %v2142 = vpop.f32.mrb[0].mxu0
    %v2143 = vadd.f32 %v1943, %v2142
    %v2144 = vpop.f32.mrb[0].mxu0
    %2145 = vmatprep.mubr.f32.mxu0 0.0
    %2146 = vmatmul.mubr.f32.gmra.mrb[0].mxu0 %v1970
    %v2147 = vpop.f32.mrb[0].mxu0
    %v2148 = vadd.f32 %v1943, %v2147
    %v2149 = vpop.f32.mrb[0].mxu0
    %2150 = vmatprep.mubr.f32.mxu0 0.0
    %2151 = vmatmul.mubr.f32.gmra.mrb[0].mxu0 %v1973
    %v2152 = vpop.f32.mrb[0].mxu0
    %v2153 = vadd.f32 %v1943, %v2152
    %v2154 = vpop.f32.mrb[0].mxu0
    %2155 = vmatprep.mubr.f32.mxu0 0.0
    %2156 = vmatmul.mubr.f32.gmra.mrb[0].mxu0 %v1976
    %v2157 = vpop.f32.mrb[0].mxu0
    %v2158 = vadd.f32 %v1943, %v2157
    %v2159 = vpop.f32.mrb[0].mxu0
    %2160 = vmatprep.mubr.f32.mxu0 0.0
    %2161 = vmatmul.mubr.f32.gmra.mrb[0].mxu0 %v1979
    %v2162 = vpop.f32.mrb[0].mxu0
    %v2163 = vadd.f32 %v1943, %v2162
    %v2164 = vpop.f32.mrb[0].mxu0
    %2165 = vmatprep.mubr.f32.mxu0 0.0
    %2166 = vmatmul.mubr.f32.gmra.mrb[0].mxu0 %v1982
    %v2167 = vpop.f32.mrb[0].mxu0
    %v2168 = vadd.f32 %v1943, %v2167
    %v2169 = vpop.f32.mrb[0].mxu0
    %2170 = vmatprep.mubr.f32.mxu0 0.0
    %2171 = vmatmul.mubr.f32.gmra.mrb[0].mxu0 %v1985
    %v2172 = vpop.f32.mrb[0].mxu0
    %v2173 = vadd.f32 %v1943, %v2172
    %v2174 = vpop.f32.mrb[0].mxu0
    %2175 = vmatprep.mubr.f32.mxu0 0.0
    %2176 = vmatmul.mubr.f32.gmra.mrb[0].mxu0 %v1988
    %v2177 = vpop.f32.mrb[0].mxu0
    %v2178 = vadd.f32 %v1943, %v2177
    %v2179 = vpop.f32.mrb[0].mxu0
    %2180 = vmatprep.mubr.f32.mxu0 0.0
    %2181 = vmatmul.mubr.f32.gmra.mrb[0].mxu0 %v1991
    %v2182 = vpop.f32.mrb[0].mxu0
    %v2183 = vadd.f32 %v1943, %v2182
    %v2184 = vpop.f32.mrb[0].mxu0
    %2185 = vmatprep.mubr.f32.mxu0 0.0
    %2186 = vmatmul.mubr.f32.gmra.mrb[0].mxu0 %v1994
    %v2187 = vpop.f32.mrb[0].mxu0
    %v2188 = vadd.f32 %v1943, %v2187
    %v2189 = vpop.f32.mrb[0].mxu0
    %2190 = vmatprep.mubr.f32.mxu0 0.0
    %2191 = vmatmul.mubr.f32.gmra.mrb[0].mxu0 %v1997
    %v2192 = vpop.f32.mrb[0].mxu0
    %v2193 = vadd.f32 %v1943, %v2192
    %v2194 = vpop.f32.mrb[0].mxu0
    %2195 = vmatprep.mubr.f32.mxu0 0.0
    %2196 = vmatmul.mubr.f32.gmra.mrb[0].mxu0 %v2000
    %v2197 = vpop.f32.mrb[0].mxu0
    %v2198 = vadd.f32 %v1943, %v2197
    %v2199 = vpop.f32.mrb[0].mxu0
    %2200 = vmatprep.mubr.f32.mxu0 0.0
    %2201 = vmatmul.mubr.f32.gmra.mrb[0].mxu0 %v2003
    %v2202 = vpop.f32.mrb[0].mxu0
    %v2203 = vadd.f32 %v1943, %v2202
    %v2204 = vpop.f32.mrb[0].mxu0
    %2205 = vmatprep.mubr.f32.mxu0 0.0
    %2206 = vmatmul.mubr.f32.gmra.mrb[0].mxu0 %v2006
    %v2207 = vpop.f32.mrb[0].mxu0
    %v2208 = vadd.f32 %v1943, %v2207
    %v2209 = vpop.f32.mrb[0].mxu0
    %2210 = vmatprep.mubr.f32.mxu0 0.0
    %2211 = vmatmul.mubr.f32.gmra.mrb[0].mxu0 %v2009
    %v2212 = vpop.f32.mrb[0].mxu0
    %v2213 = vadd.f32 %v1943, %v2212
    %v2214 = vpop.f32.mrb[0].mxu0
    %2215 = vmatprep.mubr.f32.mxu0 0.0
    %2216 = vmatmul.mubr.f32.gmra.mrb[0].mxu0 %v2012
    %v2217 = vpop.f32.mrb[0].mxu0
    %v2218 = vadd.f32 %v1943, %v2217
    %v2219 = vpop.f32.mrb[0].mxu0
    %2220 = vmatprep.mubr.f32.mxu0 0.0
    %2221 = vmatmul.mubr.f32.gmra.mrb[0].mxu0 %v2015
    %v2222 = vpop.f32.mrb[0].mxu0
    %v2223 = vadd.f32 %v1943, %v2222
    %v2224 = vpop.f32.mrb[0].mxu0
    %2225 = vmatprep.mubr.f32.mxu0 0.0
    %2226 = vmatmul.mubr.f32.gmra.mrb[0].mxu0 %v2018
    %v2227 = vpop.f32.mrb[0].mxu0
    %v2228 = vadd.f32 %v1943, %v2227
    %v2229 = vpop.f32.mrb[0].mxu0
    %2230 = vmatprep.mubr.f32.mxu0 0.0
    %2231 = vmatmul.mubr.f32.gmra.mrb[0].mxu0 %v2021
    %v2232 = vpop.f32.mrb[0].mxu0
    %v2233 = vadd.f32 %v1943, %v2232
    %v2234 = vpop.f32.mrb[0].mxu0
    %2235 = vmatprep.mubr.f32.mxu0 0.0
    %2236 = vmatmul.mubr.f32.gmra.mrb[0].mxu0 %v2024
    %v2237 = vpop.f32.mrb[0].mxu0
    %v2238 = vadd.f32 %v1943, %v2237
    %v2239 = vpop.f32.mrb[0].mxu0
    %2240 = vmatprep.mubr.f32.mxu0 0.0
    %2241 = vmatmul.mubr.f32.gmra.mrb[0].mxu0 %v2027
    %v2242 = vpop.f32.mrb[0].mxu0
    %v2243 = vadd.f32 %v1943, %v2242
    %v2244 = vpop.f32.mrb[0].mxu0
    %2245 = vmatprep.mubr.f32.mxu0 0.0
    %2246 = vmatmul.mubr.f32.gmra.mrb[0].mxu0 %v2030
    %v2247 = vpop.f32.mrb[0].mxu0
    %v2248 = vadd.f32 %v1943, %v2247
    %v2249 = vpop.f32.mrb[0].mxu0
    %2250 = vmatprep.mubr.f32.mxu0 0.0
    %2251 = vmatmul.mubr.f32.gmra.mrb[0].mxu0 %v2033
    %v2252 = vpop.f32.mrb[0].mxu0
    %v2253 = vadd.f32 %v1943, %v2252
    %v2254 = vpop.f32.mrb[0].mxu0
    %2255 = vmatprep.mubr.f32.mxu0 0.0
    %2256 = vmatmul.mubr.f32.gmra.mrb[0].mxu0 %v2036
    %v2257 = vpop.f32.mrb[0].mxu0
    %v2258 = vadd.f32 %v1943, %v2257
    %v2259 = vpop.f32.mrb[0].mxu0
    %2260 = vmatprep.mubr.f32.mxu0 0.0
    %2261 = vmatmul.mubr.f32.gmra.mrb[0].mxu0 %v2039
    %v2262 = vpop.f32.mrb[0].mxu0
    %v2263 = vadd.f32 %v1943, %v2262
    %v2264 = vpop.f32.mrb[0].mxu0
    %2265 = vdwg.mxu0
    %v2266 = vtanh.pop %v2108
    %v2267 = vtanh.pop %v2113
    %v2268 = vtanh.pop %v2118
    %v2269 = vtanh.pop %v2123
    %v2270 = vtanh.pop %v2128
    %v2271 = vtanh.pop %v2133
    %v2272 = vtanh.pop %v2138
    %v2273 = vtanh.pop %v2143
    %v2274 = vtanh.pop %v2148
    %v2275 = vtanh.pop %v2153
    %v2276 = vtanh.pop %v2158
    %v2277 = vtanh.pop %v2163
    %v2278 = vtanh.pop %v2168
    %v2279 = vtanh.pop %v2173
    %v2280 = vtanh.pop %v2178
    %v2281 = vtanh.pop %v2183
    %v2282 = vtanh.pop %v2188
    %v2283 = vtanh.pop %v2193
    %v2284 = vtanh.pop %v2198
    %v2285 = vtanh.pop %v2203
    %v2286 = vtanh.pop %v2208
    %v2287 = vtanh.pop %v2213
    %v2288 = vtanh.pop %v2218
    %v2289 = vtanh.pop %v2223
    %v2290 = vtanh.pop %v2228
    %v2291 = vtanh.pop %v2233
    %v2292 = vtanh.pop %v2238
    %v2293 = vtanh.pop %v2243
    %v2294 = vtanh.pop %v2248
    %v2295 = vtanh.pop %v2253
    %v2296 = vtanh.pop %v2258
    %v2297 = vtanh.pop %v2263
    %v2298 = vld [vmem:[%s6] sm:$0xff]
    %v2299 = vld [vmem:[%s6 + $0x8] sm:$0xff]
    %v2300 = vld [vmem:[%s6 + $0x10] sm:$0xff]
    %v2301 = vld [vmem:[%s6 + $0x18] sm:$0xff]
    %v2303 = vlaneseq
    %v2304 = vshrl.u32 %v2303, 7
    %v2305 = vsub.s32 0, %v2304
    %v2306 = vrot.slane %v35, %v2305
    %v2309 = vsel %vm78, %v2266, 0
    %v2312 = vsel %vm78, %v2267, 0
    %v2315 = vsel %vm78, %v2268, 0
    %v2318 = vsel %vm78, %v2269, 0
    %v2321 = vsel %vm78, %v2270, 0
    %v2324 = vsel %vm78, %v2271, 0
    %v2327 = vsel %vm78, %v2272, 0
    %v2330 = vsel %vm78, %v2273, 0
    %v2333 = vsel %vm78, %v2274, 0
    %v2336 = vsel %vm78, %v2275, 0
    %v2339 = vsel %vm78, %v2276, 0
    %v2342 = vsel %vm78, %v2277, 0
    %v2345 = vsel %vm78, %v2278, 0
    %v2348 = vsel %vm78, %v2279, 0
    %v2351 = vsel %vm78, %v2280, 0
    %v2354 = vsel %vm78, %v2281, 0
    %v2357 = vsel %vm78, %v2282, 0
    %v2360 = vsel %vm78, %v2283, 0
    %v2363 = vsel %vm78, %v2284, 0
    %v2366 = vsel %vm78, %v2285, 0
    %v2369 = vsel %vm78, %v2286, 0
    %v2372 = vsel %vm78, %v2287, 0
    %v2375 = vsel %vm78, %v2288, 0
    %v2378 = vsel %vm78, %v2289, 0
    %v2381 = vsel %vm78, %v2290, 0
    %v2384 = vsel %vm78, %v2291, 0
    %v2387 = vsel %vm78, %v2292, 0
    %v2390 = vsel %vm78, %v2293, 0
    %v2393 = vsel %vm78, %v2294, 0
    %v2396 = vsel %vm78, %v2295, 0
    %v2399 = vsel %vm78, %v2296, 0
    %v2402 = vsel %vm78, %v2297, 0
    %2404 = vmatprep.subr.mxu0 0.0
    %2405 = vmatpush1.msra.mxu0 %v2298
    %2406 = vmatprep.subr.mxu0 0.0
    %2407 = vmatpush1.msra.mxu0 %v2299
    %2408 = vmatprep.subr.mxu0 0.0
    %2409 = vmatpush1.msra.mxu0 %v2300
    %2410 = vmatprep.subr.mxu0 0.0
    %2411 = vmatpush1.msra.mxu0 %v2301
    %2412 = vmatprep.subr.mxu0 0.0
    %2413 = vmatpush1.msra.mxu0 0.0
    %2414 = vmatprep.subr.mxu0 0.0
    %2415 = vmatpush1.msra.mxu0 0.0
    %2416 = vmatprep.subr.mxu0 0.0
    %2417 = vmatpush1.msra.mxu0 0.0
    %2418 = vmatprep.subr.mxu0 0.0
    %2419 = vmatpush1.msra.mxu0 0.0
    %2420 = vmatprep.subr.mxu0 0.0
    %2421 = vmatpush1.msra.mxu0 0.0
    %2422 = vmatprep.subr.mxu0 0.0
    %2423 = vmatpush1.msra.mxu0 0.0
    %2424 = vmatprep.subr.mxu0 0.0
    %2425 = vmatpush1.msra.mxu0 0.0
    %2426 = vmatprep.subr.mxu0 0.0
    %2427 = vmatpush1.msra.mxu0 0.0
    %2428 = vmatprep.subr.mxu0 0.0
    %2429 = vmatpush1.msra.mxu0 0.0
    %2430 = vmatprep.subr.mxu0 0.0
    %2431 = vmatpush1.msra.mxu0 0.0
    %2432 = vmatprep.subr.mxu0 0.0
    %2433 = vmatpush1.msra.mxu0 0.0
    %2434 = vmatprep.subr.mxu0 0.0
    %2435 = vmatpush1.msra.mxu0 0.0
    %2436 = vmatprep.subr.mxu0 0.0
    %2437 = vmatpush1.msra.mxu0 0.0
    %2438 = vmatprep.subr.mxu0 0.0
    %2439 = vmatpush1.msra.mxu0 0.0
    %2440 = vmatprep.subr.mxu0 0.0
    %2441 = vmatpush1.msra.mxu0 0.0
    %2442 = vmatprep.subr.mxu0 0.0
    %2443 = vmatpush1.msra.mxu0 0.0
    %2444 = vmatprep.subr.mxu0 0.0
    %2445 = vmatpush1.msra.mxu0 0.0
    %2446 = vmatprep.subr.mxu0 0.0
    %2447 = vmatpush1.msra.mxu0 0.0
    %2448 = vmatprep.subr.mxu0 0.0
    %2449 = vmatpush1.msra.mxu0 0.0
    %2450 = vmatprep.subr.mxu0 0.0
    %2451 = vmatpush1.msra.mxu0 0.0
    %2452 = vmatprep.subr.mxu0 0.0
    %2453 = vmatpush1.msra.mxu0 0.0
    %2454 = vmatprep.subr.mxu0 0.0
    %2455 = vmatpush1.msra.mxu0 0.0
    %2456 = vmatprep.subr.mxu0 0.0
    %2457 = vmatpush1.msra.mxu0 0.0
    %2458 = vmatprep.subr.mxu0 0.0
    %2459 = vmatpush1.msra.mxu0 0.0
    %2460 = vmatprep.subr.mxu0 0.0
    %2461 = vmatpush1.msra.mxu0 0.0
    %2462 = vmatprep.subr.mxu0 0.0
    %2463 = vmatpush1.msra.mxu0 0.0
    %2464 = vmatprep.subr.mxu0 0.0
    %2465 = vmatpush1.msra.mxu0 0.0
    %2466 = vmatprep.subr.mxu0 0.0
    %2467 = vmatpush1.msra.mxu0 0.0
    %2468 = vmatprep.mubr.f32.mxu0 0.0
    %2469 = vmatmul.mubr.f32.gmra.mrb[0].mxu0 %v2309
    %v2470 = vpop.f32.mrb[0].mxu0
    %v2471 = vadd.f32 %v2306, %v2470
    %v2472 = vpop.f32.mrb[0].mxu0
    %2473 = vmatprep.mubr.f32.mxu0 0.0
    %2474 = vmatmul.mubr.f32.gmra.mrb[0].mxu0 %v2312
    %v2475 = vpop.f32.mrb[0].mxu0
    %v2476 = vadd.f32 %v2306, %v2475
    %v2477 = vpop.f32.mrb[0].mxu0
    %2478 = vmatprep.mubr.f32.mxu0 0.0
    %2479 = vmatmul.mubr.f32.gmra.mrb[0].mxu0 %v2315
    %v2480 = vpop.f32.mrb[0].mxu0
    %v2481 = vadd.f32 %v2306, %v2480
    %v2482 = vpop.f32.mrb[0].mxu0
    %2483 = vmatprep.mubr.f32.mxu0 0.0
    %2484 = vmatmul.mubr.f32.gmra.mrb[0].mxu0 %v2318
    %v2485 = vpop.f32.mrb[0].mxu0
    %v2486 = vadd.f32 %v2306, %v2485
    %v2487 = vpop.f32.mrb[0].mxu0
    %2488 = vmatprep.mubr.f32.mxu0 0.0
    %2489 = vmatmul.mubr.f32.gmra.mrb[0].mxu0 %v2321
    %v2490 = vpop.f32.mrb[0].mxu0
    %v2491 = vadd.f32 %v2306, %v2490
    %v2492 = vpop.f32.mrb[0].mxu0
    %2493 = vmatprep.mubr.f32.mxu0 0.0
    %2494 = vmatmul.mubr.f32.gmra.mrb[0].mxu0 %v2324
    %v2495 = vpop.f32.mrb[0].mxu0
    %v2496 = vadd.f32 %v2306, %v2495
    %v2497 = vpop.f32.mrb[0].mxu0
    %2498 = vmatprep.mubr.f32.mxu0 0.0
    %2499 = vmatmul.mubr.f32.gmra.mrb[0].mxu0 %v2327
    %v2500 = vpop.f32.mrb[0].mxu0
    %v2501 = vadd.f32 %v2306, %v2500
    %v2502 = vpop.f32.mrb[0].mxu0
    %2503 = vmatprep.mubr.f32.mxu0 0.0
    %2504 = vmatmul.mubr.f32.gmra.mrb[0].mxu0 %v2330
    %v2505 = vpop.f32.mrb[0].mxu0
    %v2506 = vadd.f32 %v2306, %v2505
    %v2507 = vpop.f32.mrb[0].mxu0
    %2508 = vmatprep.mubr.f32.mxu0 0.0
    %2509 = vmatmul.mubr.f32.gmra.mrb[0].mxu0 %v2333
    %v2510 = vpop.f32.mrb[0].mxu0
    %v2511 = vadd.f32 %v2306, %v2510
    %v2512 = vpop.f32.mrb[0].mxu0
    %2513 = vmatprep.mubr.f32.mxu0 0.0
    %2514 = vmatmul.mubr.f32.gmra.mrb[0].mxu0 %v2336
    %v2515 = vpop.f32.mrb[0].mxu0
    %v2516 = vadd.f32 %v2306, %v2515
    %v2517 = vpop.f32.mrb[0].mxu0
    %2518 = vmatprep.mubr.f32.mxu0 0.0
    %2519 = vmatmul.mubr.f32.gmra.mrb[0].mxu0 %v2339
    %v2520 = vpop.f32.mrb[0].mxu0
    %v2521 = vadd.f32 %v2306, %v2520
    %v2522 = vpop.f32.mrb[0].mxu0
    %2523 = vmatprep.mubr.f32.mxu0 0.0
    %2524 = vmatmul.mubr.f32.gmra.mrb[0].mxu0 %v2342
    %v2525 = vpop.f32.mrb[0].mxu0
    %v2526 = vadd.f32 %v2306, %v2525
    %v2527 = vpop.f32.mrb[0].mxu0
    %2528 = vmatprep.mubr.f32.mxu0 0.0
    %2529 = vmatmul.mubr.f32.gmra.mrb[0].mxu0 %v2345
    %v2530 = vpop.f32.mrb[0].mxu0
    %v2531 = vadd.f32 %v2306, %v2530
    %v2532 = vpop.f32.mrb[0].mxu0
    %2533 = vmatprep.mubr.f32.mxu0 0.0
    %2534 = vmatmul.mubr.f32.gmra.mrb[0].mxu0 %v2348
    %v2535 = vpop.f32.mrb[0].mxu0
    %v2536 = vadd.f32 %v2306, %v2535
    %v2537 = vpop.f32.mrb[0].mxu0
    %2538 = vmatprep.mubr.f32.mxu0 0.0
    %2539 = vmatmul.mubr.f32.gmra.mrb[0].mxu0 %v2351
    %v2540 = vpop.f32.mrb[0].mxu0
    %v2541 = vadd.f32 %v2306, %v2540
    %v2542 = vpop.f32.mrb[0].mxu0
    %2543 = vmatprep.mubr.f32.mxu0 0.0
    %2544 = vmatmul.mubr.f32.gmra.mrb[0].mxu0 %v2354
    %v2545 = vpop.f32.mrb[0].mxu0
    %v2546 = vadd.f32 %v2306, %v2545
    %v2547 = vpop.f32.mrb[0].mxu0
    %2548 = vmatprep.mubr.f32.mxu0 0.0
    %2549 = vmatmul.mubr.f32.gmra.mrb[0].mxu0 %v2357
    %v2550 = vpop.f32.mrb[0].mxu0
    %v2551 = vadd.f32 %v2306, %v2550
    %v2552 = vpop.f32.mrb[0].mxu0
    %2553 = vmatprep.mubr.f32.mxu0 0.0
    %2554 = vmatmul.mubr.f32.gmra.mrb[0].mxu0 %v2360
    %v2555 = vpop.f32.mrb[0].mxu0
    %v2556 = vadd.f32 %v2306, %v2555
    %v2557 = vpop.f32.mrb[0].mxu0
    %2558 = vmatprep.mubr.f32.mxu0 0.0
    %2559 = vmatmul.mubr.f32.gmra.mrb[0].mxu0 %v2363
    %v2560 = vpop.f32.mrb[0].mxu0
    %v2561 = vadd.f32 %v2306, %v2560
    %v2562 = vpop.f32.mrb[0].mxu0
    %2563 = vmatprep.mubr.f32.mxu0 0.0
    %2564 = vmatmul.mubr.f32.gmra.mrb[0].mxu0 %v2366
    %v2565 = vpop.f32.mrb[0].mxu0
    %v2566 = vadd.f32 %v2306, %v2565
    %v2567 = vpop.f32.mrb[0].mxu0
    %2568 = vmatprep.mubr.f32.mxu0 0.0
    %2569 = vmatmul.mubr.f32.gmra.mrb[0].mxu0 %v2369
    %v2570 = vpop.f32.mrb[0].mxu0
    %v2571 = vadd.f32 %v2306, %v2570
    %v2572 = vpop.f32.mrb[0].mxu0
    %2573 = vmatprep.mubr.f32.mxu0 0.0
    %2574 = vmatmul.mubr.f32.gmra.mrb[0].mxu0 %v2372
    %v2575 = vpop.f32.mrb[0].mxu0
    %v2576 = vadd.f32 %v2306, %v2575
    %v2577 = vpop.f32.mrb[0].mxu0
    %2578 = vmatprep.mubr.f32.mxu0 0.0
    %2579 = vmatmul.mubr.f32.gmra.mrb[0].mxu0 %v2375
    %v2580 = vpop.f32.mrb[0].mxu0
    %v2581 = vadd.f32 %v2306, %v2580
    %v2582 = vpop.f32.mrb[0].mxu0
    %2583 = vmatprep.mubr.f32.mxu0 0.0
    %2584 = vmatmul.mubr.f32.gmra.mrb[0].mxu0 %v2378
    %v2585 = vpop.f32.mrb[0].mxu0
    %v2586 = vadd.f32 %v2306, %v2585
    %v2587 = vpop.f32.mrb[0].mxu0
    %2588 = vmatprep.mubr.f32.mxu0 0.0
    %2589 = vmatmul.mubr.f32.gmra.mrb[0].mxu0 %v2381
    %v2590 = vpop.f32.mrb[0].mxu0
    %v2591 = vadd.f32 %v2306, %v2590
    %v2592 = vpop.f32.mrb[0].mxu0
    %2593 = vmatprep.mubr.f32.mxu0 0.0
    %2594 = vmatmul.mubr.f32.gmra.mrb[0].mxu0 %v2384
    %v2595 = vpop.f32.mrb[0].mxu0
    %v2596 = vadd.f32 %v2306, %v2595
    %v2597 = vpop.f32.mrb[0].mxu0
    %2598 = vmatprep.mubr.f32.mxu0 0.0
    %2599 = vmatmul.mubr.f32.gmra.mrb[0].mxu0 %v2387
    %v2600 = vpop.f32.mrb[0].mxu0
    %v2601 = vadd.f32 %v2306, %v2600
    %v2602 = vpop.f32.mrb[0].mxu0
    %2603 = vmatprep.mubr.f32.mxu0 0.0
    %2604 = vmatmul.mubr.f32.gmra.mrb[0].mxu0 %v2390
    %v2605 = vpop.f32.mrb[0].mxu0
    %v2606 = vadd.f32 %v2306, %v2605
    %v2607 = vpop.f32.mrb[0].mxu0
    %2608 = vmatprep.mubr.f32.mxu0 0.0
    %2609 = vmatmul.mubr.f32.gmra.mrb[0].mxu0 %v2393
    %v2610 = vpop.f32.mrb[0].mxu0
    %v2611 = vadd.f32 %v2306, %v2610
    %v2612 = vpop.f32.mrb[0].mxu0
    %2613 = vmatprep.mubr.f32.mxu0 0.0
    %2614 = vmatmul.mubr.f32.gmra.mrb[0].mxu0 %v2396
    %v2615 = vpop.f32.mrb[0].mxu0
    %v2616 = vadd.f32 %v2306, %v2615
    %v2617 = vpop.f32.mrb[0].mxu0
    %2618 = vmatprep.mubr.f32.mxu0 0.0
    %2619 = vmatmul.mubr.f32.gmra.mrb[0].mxu0 %v2399
    %v2620 = vpop.f32.mrb[0].mxu0
    %v2621 = vadd.f32 %v2306, %v2620
    %v2622 = vpop.f32.mrb[0].mxu0
    %2623 = vmatprep.mubr.f32.mxu0 0.0
    %2624 = vmatmul.mubr.f32.gmra.mrb[0].mxu0 %v2402
    %v2625 = vpop.f32.mrb[0].mxu0
    %v2626 = vadd.f32 %v2306, %v2625
    %v2627 = vpop.f32.mrb[0].mxu0
    %2628 = vdwg.mxu0
    %2629 = vrot.lane.b32.xlu0 %v1542, 111
    %v2630 = vpop.permute.xlu0 %2629
    %2631 = vrot.lane.b32.xlu0 %v1543, 111
    %v2632 = vpop.permute.xlu0 %2631
    %2633 = vrot.lane.b32.xlu0 %v1544, 111
    %v2634 = vpop.permute.xlu0 %2633
    %2635 = vrot.lane.b32.xlu0 %v1545, 111
    %v2636 = vpop.permute.xlu0 %2635
    %2637 = vrot.lane.b32.xlu0 %v1546, 111
    %v2638 = vpop.permute.xlu0 %2637
    %2639 = vrot.lane.b32.xlu0 %v1547, 111
    %v2640 = vpop.permute.xlu0 %2639
    %2641 = vrot.lane.b32.xlu0 %v1548, 111
    %v2642 = vpop.permute.xlu0 %2641
    %2643 = vrot.lane.b32.xlu0 %v1549, 111
    %v2644 = vpop.permute.xlu0 %2643
    %2645 = vrot.lane.b32.xlu0 %v1550, 111
    %v2646 = vpop.permute.xlu0 %2645
    %2647 = vrot.lane.b32.xlu0 %v1551, 111
    %v2648 = vpop.permute.xlu0 %2647
    %2649 = vrot.lane.b32.xlu0 %v1552, 111
    %v2650 = vpop.permute.xlu0 %2649
    %2651 = vrot.lane.b32.xlu0 %v1553, 111
    %v2652 = vpop.permute.xlu0 %2651
    %2653 = vrot.lane.b32.xlu0 %v1554, 111
    %v2654 = vpop.permute.xlu0 %2653
    %2655 = vrot.lane.b32.xlu0 %v1555, 111
    %v2656 = vpop.permute.xlu0 %2655
    %2657 = vrot.lane.b32.xlu0 %v1556, 111
    %v2658 = vpop.permute.xlu0 %2657
    %2659 = vrot.lane.b32.xlu0 %v1557, 111
    %v2660 = vpop.permute.xlu0 %2659
    %2661 = vrot.lane.b32.xlu0 %v1558, 111
    %v2662 = vpop.permute.xlu0 %2661
    %2663 = vrot.lane.b32.xlu0 %v1559, 111
    %v2664 = vpop.permute.xlu0 %2663
    %2665 = vrot.lane.b32.xlu0 %v1560, 111
    %v2666 = vpop.permute.xlu0 %2665
    %2667 = vrot.lane.b32.xlu0 %v1561, 111
    %v2668 = vpop.permute.xlu0 %2667
    %2669 = vrot.lane.b32.xlu0 %v1562, 111
    %v2670 = vpop.permute.xlu0 %2669
    %2671 = vrot.lane.b32.xlu0 %v1563, 111
    %v2672 = vpop.permute.xlu0 %2671
    %2673 = vrot.lane.b32.xlu0 %v1564, 111
    %v2674 = vpop.permute.xlu0 %2673
    %2675 = vrot.lane.b32.xlu0 %v1565, 111
    %v2676 = vpop.permute.xlu0 %2675
    %2677 = vrot.lane.b32.xlu0 %v1566, 111
    %v2678 = vpop.permute.xlu0 %2677
    %2679 = vrot.lane.b32.xlu0 %v1567, 111
    %v2680 = vpop.permute.xlu0 %2679
    %2681 = vrot.lane.b32.xlu0 %v1568, 111
    %v2682 = vpop.permute.xlu0 %2681
    %2683 = vrot.lane.b32.xlu0 %v1569, 111
    %v2684 = vpop.permute.xlu0 %2683
    %2685 = vrot.lane.b32.xlu0 %v1570, 111
    %v2686 = vpop.permute.xlu0 %2685
    %2687 = vrot.lane.b32.xlu0 %v1571, 111
    %v2688 = vpop.permute.xlu0 %2687
    %2689 = vrot.lane.b32.xlu0 %v1572, 111
    %v2690 = vpop.permute.xlu0 %2689
    %2691 = vrot.lane.b32.xlu0 %v1573, 111
    %v2692 = vpop.permute.xlu0 %2691
    %2757 = vrot.lane.b32.xlu0 %v968, 119
    %v2758 = vpop.permute.xlu0 %2757
    %2759 = vrot.lane.b32.xlu0 %v973, 119
    %v2760 = vpop.permute.xlu0 %2759
    %2761 = vrot.lane.b32.xlu0 %v978, 119
    %v2762 = vpop.permute.xlu0 %2761
    %2763 = vrot.lane.b32.xlu0 %v983, 119
    %v2764 = vpop.permute.xlu0 %2763
    %2765 = vrot.lane.b32.xlu0 %v988, 119
    %v2766 = vpop.permute.xlu0 %2765
    %2767 = vrot.lane.b32.xlu0 %v993, 119
    %v2768 = vpop.permute.xlu0 %2767
    %2769 = vrot.lane.b32.xlu0 %v998, 119
    %v2770 = vpop.permute.xlu0 %2769
    %2771 = vrot.lane.b32.xlu0 %v1003, 119
    %v2772 = vpop.permute.xlu0 %2771
    %2773 = vrot.lane.b32.xlu0 %v1008, 119
    %v2774 = vpop.permute.xlu0 %2773
    %2775 = vrot.lane.b32.xlu0 %v1013, 119
    %v2776 = vpop.permute.xlu0 %2775
    %2777 = vrot.lane.b32.xlu0 %v1018, 119
    %v2778 = vpop.permute.xlu0 %2777
    %2779 = vrot.lane.b32.xlu0 %v1023, 119
    %v2780 = vpop.permute.xlu0 %2779
    %2781 = vrot.lane.b32.xlu0 %v1028, 119
    %v2782 = vpop.permute.xlu0 %2781
    %2783 = vrot.lane.b32.xlu0 %v1033, 119
    %v2784 = vpop.permute.xlu0 %2783
    %2785 = vrot.lane.b32.xlu0 %v1038, 119
    %v2786 = vpop.permute.xlu0 %2785
    %2787 = vrot.lane.b32.xlu0 %v1043, 119
    %v2788 = vpop.permute.xlu0 %2787
    %2789 = vrot.lane.b32.xlu0 %v1048, 119
    %v2790 = vpop.permute.xlu0 %2789
    %2791 = vrot.lane.b32.xlu0 %v1053, 119
    %v2792 = vpop.permute.xlu0 %2791
    %2793 = vrot.lane.b32.xlu0 %v1058, 119
    %v2794 = vpop.permute.xlu0 %2793
    %2795 = vrot.lane.b32.xlu0 %v1063, 119
    %v2796 = vpop.permute.xlu0 %2795
    %2797 = vrot.lane.b32.xlu0 %v1068, 119
    %v2798 = vpop.permute.xlu0 %2797
    %2799 = vrot.lane.b32.xlu0 %v1073, 119
    %v2800 = vpop.permute.xlu0 %2799
    %2801 = vrot.lane.b32.xlu0 %v1078, 119
    %v2802 = vpop.permute.xlu0 %2801
    %2803 = vrot.lane.b32.xlu0 %v1083, 119
    %v2804 = vpop.permute.xlu0 %2803
    %2805 = vrot.lane.b32.xlu0 %v1088, 119
    %v2806 = vpop.permute.xlu0 %2805
    %2807 = vrot.lane.b32.xlu0 %v1093, 119
    %v2808 = vpop.permute.xlu0 %2807
    %2809 = vrot.lane.b32.xlu0 %v1098, 119
    %v2810 = vpop.permute.xlu0 %2809
    %2811 = vrot.lane.b32.xlu0 %v1103, 119
    %v2812 = vpop.permute.xlu0 %2811
    %2813 = vrot.lane.b32.xlu0 %v1108, 119
    %v2814 = vpop.permute.xlu0 %2813
    %2815 = vrot.lane.b32.xlu0 %v1113, 119
    %v2816 = vpop.permute.xlu0 %2815
    %2817 = vrot.lane.b32.xlu0 %v1118, 119
    %v2818 = vpop.permute.xlu0 %2817
    %2819 = vrot.lane.b32.xlu0 %v1123, 119
    %v2820 = vpop.permute.xlu0 %2819
    %vm2853 = vcmask 908288
    %v2854 = vsel %vm2853, %v2471, %v2630
    %v2855 = vsel %vm2853, %v2476, %v2632
    %v2856 = vsel %vm2853, %v2481, %v2634
    %v2857 = vsel %vm2853, %v2486, %v2636
    %v2858 = vsel %vm2853, %v2491, %v2638
    %v2859 = vsel %vm2853, %v2496, %v2640
    %v2860 = vsel %vm2853, %v2501, %v2642
    %v2861 = vsel %vm2853, %v2506, %v2644
    %v2862 = vsel %vm2853, %v2511, %v2646
    %v2863 = vsel %vm2853, %v2516, %v2648
    %v2864 = vsel %vm2853, %v2521, %v2650
    %v2865 = vsel %vm2853, %v2526, %v2652
    %v2866 = vsel %vm2853, %v2531, %v2654
    %v2867 = vsel %vm2853, %v2536, %v2656
    %v2868 = vsel %vm2853, %v2541, %v2658
    %v2869 = vsel %vm2853, %v2546, %v2660
    %v2870 = vsel %vm2853, %v2551, %v2662
    %v2871 = vsel %vm2853, %v2556, %v2664
    %v2872 = vsel %vm2853, %v2561, %v2666
    %v2873 = vsel %vm2853, %v2566, %v2668
    %v2874 = vsel %vm2853, %v2571, %v2670
    %v2875 = vsel %vm2853, %v2576, %v2672
    %v2876 = vsel %vm2853, %v2581, %v2674
    %v2877 = vsel %vm2853, %v2586, %v2676
    %v2878 = vsel %vm2853, %v2591, %v2678
    %v2879 = vsel %vm2853, %v2596, %v2680
    %v2880 = vsel %vm2853, %v2601, %v2682
    %v2881 = vsel %vm2853, %v2606, %v2684
    %v2882 = vsel %vm2853, %v2611, %v2686
    %v2883 = vsel %vm2853, %v2616, %v2688
    %v2884 = vsel %vm2853, %v2621, %v2690
    %v2885 = vsel %vm2853, %v2626, %v2692
    %vm2886 = vcmask 973824
    %v2887 = vsel %vm2886, %v2854, %v2758
    %v2888 = vsel %vm2886, %v2855, %v2760
    %v2889 = vsel %vm2886, %v2856, %v2762
    %v2890 = vsel %vm2886, %v2857, %v2764
    %v2891 = vsel %vm2886, %v2858, %v2766
    %v2892 = vsel %vm2886, %v2859, %v2768
    %v2893 = vsel %vm2886, %v2860, %v2770
    %v2894 = vsel %vm2886, %v2861, %v2772
    %v2895 = vsel %vm2886, %v2862, %v2774
    %v2896 = vsel %vm2886, %v2863, %v2776
    %v2897 = vsel %vm2886, %v2864, %v2778
    %v2898 = vsel %vm2886, %v2865, %v2780
    %v2899 = vsel %vm2886, %v2866, %v2782
    %v2900 = vsel %vm2886, %v2867, %v2784
    %v2901 = vsel %vm2886, %v2868, %v2786
    %v2902 = vsel %vm2886, %v2869, %v2788
    %v2903 = vsel %vm2886, %v2870, %v2790
    %v2904 = vsel %vm2886, %v2871, %v2792
    %v2905 = vsel %vm2886, %v2872, %v2794
    %v2906 = vsel %vm2886, %v2873, %v2796
    %v2907 = vsel %vm2886, %v2874, %v2798
    %v2908 = vsel %vm2886, %v2875, %v2800
    %v2909 = vsel %vm2886, %v2876, %v2802
    %v2910 = vsel %vm2886, %v2877, %v2804
    %v2911 = vsel %vm2886, %v2878, %v2806
    %v2912 = vsel %vm2886, %v2879, %v2808
    %v2913 = vsel %vm2886, %v2880, %v2810
    %v2914 = vsel %vm2886, %v2881, %v2812
    %v2915 = vsel %vm2886, %v2882, %v2814
    %v2916 = vsel %vm2886, %v2883, %v2816
    %v2917 = vsel %vm2886, %v2884, %v2818
    %v2918 = vsel %vm2886, %v2885, %v2820
    %2919 = vst [vmem:[#allocation2] sm:$0xff] %v2887
    %2920 = vst [vmem:[#allocation2 + $0x8] sm:$0xff] %v2888
    %2921 = vst [vmem:[#allocation2 + $0x10] sm:$0xff] %v2889
    %2922 = vst [vmem:[#allocation2 + $0x18] sm:$0xff] %v2890
    %2923 = vst [vmem:[#allocation2 + $0x20] sm:$0xff] %v2891
    %2924 = vst [vmem:[#allocation2 + $0x28] sm:$0xff] %v2892
    %2925 = vst [vmem:[#allocation2 + $0x30] sm:$0xff] %v2893
    %2926 = vst [vmem:[#allocation2 + $0x38] sm:$0xff] %v2894
    %2927 = vst [vmem:[#allocation2 + $0x40] sm:$0xff] %v2895
    %2928 = vst [vmem:[#allocation2 + $0x48] sm:$0xff] %v2896
    %2929 = vst [vmem:[#allocation2 + $0x50] sm:$0xff] %v2897
    %2930 = vst [vmem:[#allocation2 + $0x58] sm:$0xff] %v2898
    %2931 = vst [vmem:[#allocation2 + $0x60] sm:$0xff] %v2899
    %2932 = vst [vmem:[#allocation2 + $0x68] sm:$0xff] %v2900
    %2933 = vst [vmem:[#allocation2 + $0x70] sm:$0xff] %v2901
    %2934 = vst [vmem:[#allocation2 + $0x78] sm:$0xff] %v2902
    %2935 = vst [vmem:[#allocation2 + $0x80] sm:$0xff] %v2903
    %2936 = vst [vmem:[#allocation2 + $0x88] sm:$0xff] %v2904
    %2937 = vst [vmem:[#allocation2 + $0x90] sm:$0xff] %v2905
    %2938 = vst [vmem:[#allocation2 + $0x98] sm:$0xff] %v2906
    %2939 = vst [vmem:[#allocation2 + $0xa0] sm:$0xff] %v2907
    %2940 = vst [vmem:[#allocation2 + $0xa8] sm:$0xff] %v2908
    %2941 = vst [vmem:[#allocation2 + $0xb0] sm:$0xff] %v2909
    %2942 = vst [vmem:[#allocation2 + $0xb8] sm:$0xff] %v2910
    %2943 = vst [vmem:[#allocation2 + $0xc0] sm:$0xff] %v2911
    %2944 = vst [vmem:[#allocation2 + $0xc8] sm:$0xff] %v2912
    %2945 = vst [vmem:[#allocation2 + $0xd0] sm:$0xff] %v2913
    %2946 = vst [vmem:[#allocation2 + $0xd8] sm:$0xff] %v2914
    %2947 = vst [vmem:[#allocation2 + $0xe0] sm:$0xff] %v2915
    %2948 = vst [vmem:[#allocation2 + $0xe8] sm:$0xff] %v2916
    %2949 = vst [vmem:[#allocation2 + $0xf0] sm:$0xff] %v2917
    %2950 = vst [vmem:[#allocation2 + $0xf8] sm:$0xff] %v2918
    // Predicated region
    $region34: #{tpu_custom_call.1} parent=1 // pred_check
      _
    $region35: #{tpu_custom_call.1} parent=1 // pred_check_branch
      %2952 = sbr.rel (0) target = $region37
    $region36: #{tpu_custom_call.1} parent=1 // pred_region
      %s2954 = ssub.s32 4096, 4096
      %2955 = vsyncadd [#allocation3], %s2954
      %s2956 = sshll.u32 [#allocation2], 4
      %s2957 = int_to_ptr.vmem [resolvable:$true] %s2956
      %2962 = dma.vmem_to_hbm [thread:$0]  %s2957, 4096, %s8, [#allocation3], 128, 128, 8
    $region37: #{tpu_custom_call.1} parent=1 // pred_fallthru
      _
    // Predicated region
    $region38: #{tpu_custom_call.1} parent=1 // pred_check
      _
    $region39: #{tpu_custom_call.1} parent=1 // pred_check_branch
      %2964 = sbr.rel (0) target = $region41
    $region40: #{tpu_custom_call.1} parent=1 // pred_region
      %2965 = dma.done [#allocation3], 4096
    $region41: #{tpu_custom_call.1} parent=1 // pred_fallthru
      _
    %2966 = vsyncpa [#allocation3], 1

</llo_original>
